<compile_context>
chip_gen: v7x
topology: tpu7x:2x2x1
jax: 0.10.0
libtpu: 0.0.40
codegen_flags: <defaults>
</compile_context>

<pallas_src>
import functools

import jax
import jax.numpy as jnp
from jax import lax
from jax.experimental import pallas as pl
from jax.experimental.pallas import tpu as pltpu


def _round_up(v: int, m: int) -> int:
    return ((v + m - 1) // m) * m


def _vmem_cap_bytes() -> int:
    """Physical VMEM per TensorCore, with a conservative fallback."""
    try:
        return int(pltpu.get_tpu_info().vmem_capacity_bytes)
    except Exception:  # unknown platform / attribute -> assume the smallest (v7x)
        return 64 * 2**20


def _sinkhorn_kernel(x_ref, o_ref, p_ref, *, inv_eps: float, niters: int,
                     b_valid: int, n_valid: int):
    # x_ref / o_ref: (B_pad, N_pad) tile in VMEM (one independent problem).
    # p_ref: f32 VMEM scratch holding the immutable P0 = exp((x - colmax)/eps).
    b_pad, n_pad = p_ref.shape
    pad_rows = b_valid < b_pad
    pad_cols = n_valid < n_pad
    f32 = jnp.float32
    tiny = f32(jnp.finfo(jnp.float32).tiny)
    hi = lax.Precision.HIGHEST  # exact f32 matvecs on the MXU

    x = x_ref[...].astype(f32)

    # Validity masks for padded rows/columns (only traced when padding exists).
    row_ok = col_ok = row_ok_lane = ok2d = None
    if pad_rows:
        row_ok = lax.broadcasted_iota(jnp.int32, (b_pad, 1), 0) < b_valid       # (B,1)
        row_ok_lane = lax.broadcasted_iota(jnp.int32, (1, b_pad), 1) < b_valid  # (1,B)
    if pad_cols:
        col_ok = lax.broadcasted_iota(jnp.int32, (1, n_pad), 1) < n_valid       # (1,N)
    if pad_rows and pad_cols:
        ok2d = jnp.logical_and(row_ok, col_ok)
    elif pad_rows:
        ok2d = row_ok
    elif pad_cols:
        ok2d = col_ok

    # Padded entries must never win the max; exp() results there are masked to 0.
    x_for_max = x if ok2d is None else jnp.where(ok2d, x, f32(-1e30))

    if niters == 0:
        # Reference degenerates to a pure row normalization of P; a per-row
        # constant cancels exactly, so shift by the per-row max for stability.
        rowmax = jnp.max(x_for_max, axis=1, keepdims=True)                      # (B,1)
        p = jnp.exp((x - rowmax) * f32(inv_eps))
        if ok2d is not None:
            p = jnp.where(ok2d, p, f32(0.0))
        denom = jnp.sum(p, axis=1, keepdims=True)
        if pad_rows:
            denom = jnp.where(row_ok, denom, f32(1.0))
        denom = jnp.maximum(denom, tiny)
        o_ref[...] = (p * pl.reciprocal(denom, approx=False)).astype(o_ref.dtype)
        return

    # Per-column max shift: cancels exactly in the first u-normalization and
    # guarantees exp(0)=1 in every valid column (no all-zero columns -> no NaN).
    colmax = jnp.max(x_for_max, axis=0, keepdims=True)                          # (1,N)
    p = jnp.exp((x - colmax) * f32(inv_eps))
    if ok2d is not None:
        p = jnp.where(ok2d, p, f32(0.0))
    p_ref[...] = p  # single immutable f32 copy; never rewritten below.

    r = f32(1.0 / n_valid)  # row-marginal of Q (per class)
    c = f32(1.0 / b_valid)  # col-marginal of Q (per minibatch element)

    # Scaling vectors: current P == beta(row) * P0 * alpha(col).  Only these
    # small vectors are updated per iteration; P0 stays untouched in scratch.
    beta = jnp.ones((1, b_pad), f32)
    for it in range(niters):
        # u_k = alpha_k * s_k with s = beta @ P0  (MXU matvec, (1,B)@(B,N)).
        s = jnp.dot(beta, p_ref[...], preferred_element_type=f32, precision=hi)  # (1,N)
        if pad_cols:
            s = jnp.where(col_ok, s, f32(1.0))
        s = jnp.maximum(s, tiny)
        alpha = r * pl.reciprocal(s, approx=False)                               # (1,N)

        if it < niters - 1:
            # col_b = beta_b * t_b with t = P0 @ alpha (contract N) -> (1,B).
            t = lax.dot_general(alpha, p_ref[...],
                                dimension_numbers=(((1,), (1,)), ((), ())),
                                preferred_element_type=f32, precision=hi)        # (1,B)
            if pad_rows:
                t = jnp.where(row_ok_lane, t, f32(1.0))
            t = jnp.maximum(t, tiny)
            beta = c * pl.reciprocal(t, approx=False)
        else:
            # Fused epilogue: after the last column scaling, the reference's
            # trailing row normalization is exactly  out = P0 * alpha / t.
            t = lax.dot_general(p_ref[...], alpha,
                                dimension_numbers=(((1,), (1,)), ((), ())),
                                preferred_element_type=f32, precision=hi)        # (B,1)
            if pad_rows:
                t = jnp.where(row_ok, t, f32(1.0))
            t = jnp.maximum(t, tiny)
            o_ref[...] = (p_ref[...] * alpha *
                          pl.reciprocal(t, approx=False)).astype(o_ref.dtype)


def sinkhorn_knopp_pallas(scores: jax.Array, eps: float = 0.05, niters: int = 3) -> jax.Array:
    """Pallas Sinkhorn-Knopp on (B, N) scores, or stacked (G, B, N) problems.

    On v7x the stacked G axis is sharded across both TensorCores; make G even
    when stacking independent problems to keep both cores busy.
    """
    squeeze = scores.ndim == 2
    if squeeze:
        scores = scores[None]
    g, b, n = scores.shape
    dtype = scores.dtype
    itemsize = jnp.dtype(dtype).itemsize

    # Lane/sublane alignment: N -> multiple of 128, B -> dtype-dependent sublane
    # multiple.  Padded rows/cols are masked out inside the kernel.
    sub = {4: 8, 2: 16, 1: 32}.get(itemsize, 8)
    b_pad = _round_up(max(b, sub), sub)
    n_pad = _round_up(max(n, 128), 128)
    padded = (b_pad != b) or (n_pad != n)
    scores_in = jnp.pad(scores, ((0, 0), (0, b_pad - b), (0, n_pad - n))) if padded else scores

    kernel = functools.partial(_sinkhorn_kernel, inv_eps=1.0 / eps, niters=niters,
                               b_valid=b, n_valid=n)

    # Exact-ish VMEM budget: double-buffered in + out tiles at storage width,
    # one resident f32 P0 scratch, ~2 transient f32 full-tile temps (exp input /
    # epilogue product before cast), plus small-vector + Mosaic headroom.
    tile_store = b_pad * n_pad * itemsize
    tile_f32 = b_pad * n_pad * 4
    vmem_need = 4 * tile_store + 3 * tile_f32 + (2 << 20)
    vmem_cap = int(0.85 * _vmem_cap_bytes())          # 0.85*64MiB on v7x, 0.85*128MiB v5e/v6e
    vmem_limit = int(min(vmem_cap, max(32 * 2**20, vmem_need)))

    out = pl.pallas_call(
        kernel,
        out_shape=jax.ShapeDtypeStruct((g, b_pad, n_pad), dtype),
        grid_spec=pltpu.PrefetchScalarGridSpec(
            num_scalar_prefetch=0,
            grid=(g,),
            in_specs=[pl.BlockSpec((None, b_pad, n_pad), lambda i: (i, 0, 0))],
            out_specs=pl.BlockSpec((None, b_pad, n_pad), lambda i: (i, 0, 0)),
            scratch_shapes=[pltpu.VMEM((b_pad, n_pad), jnp.float32)],
        ),
        compiler_params=pltpu.CompilerParams(
            # Independent problems -> shard across both TensorCores on v7x.
            dimension_semantics=("parallel",),
            vmem_limit_bytes=vmem_limit,
        ),
        # Share the HBM buffer with the output when the caller donates scores.
        input_output_aliases={0: 0},
    )(scores_in)

    if padded:
        out = out[:, :b, :n]
    return out[0] if squeeze else out


class SinkhornKnoppCentering:
    """JAX/Pallas counterpart of SinkhornKnoppCenteringModule (forward pass only)."""

    def __init__(self, use_cache=False, cache_size: int = 1000, eps: float = 0.05,
                 niters: int = 3, n_classes: int = 1024):
        self.cache_size = cache_size
        self.eps = eps
        self.niters = niters
        self.use_cache = use_cache
        # Buffers (deterministic init, matching register_buffer shapes).
        self.queue = jnp.zeros((cache_size, n_classes), jnp.float32)
        self.queue_size = jnp.array(0, jnp.int32)

    def __call__(self, scores: jax.Array) -> jax.Array:
        if self.use_cache:
            # TODO(synk): stateful queue roll / dynamic queue_size slicing has no
            # clean static-shape Pallas equivalent; only the use_cache=False path
            # (the default) is implemented here.
            raise NotImplementedError("use_cache=True path not implemented")
        return sinkhorn_knopp_pallas(scores, eps=self.eps, niters=self.niters)


def _sinkhorn_ref(scores, eps=0.05, niters=3):
    """Pure-JAX reference mirroring the PyTorch code exactly (for sanity check)."""
    q = jnp.exp(scores.astype(jnp.float32) / eps).T
    q = q / jnp.sum(q)
    k, b = q.shape
    r = jnp.ones((k,), jnp.float32) / k
    c = jnp.ones((b,), jnp.float32) / b
    for _ in range(niters):
        u = jnp.sum(q, axis=1)
        q = q * (r / u)[:, None]
        q = q * (c / jnp.sum(q, axis=0))[None, :]
    return (q / jnp.sum(q, axis=0, keepdims=True)).T.astype(scores.dtype)


if __name__ == "__main__":
    key = jax.random.PRNGKey(0)

    # 1) Aligned 2-D path: B x N = 8 x 128.
    B, N = 8, 128
    scores = 0.5 * jax.random.normal(key, (B, N), jnp.float32)
    ref = _sinkhorn_ref(scores, eps=0.05, niters=3)
    module = SinkhornKnoppCentering(use_cache=False, eps=0.05, niters=3, n_classes=N)
    out = jax.block_until_ready(module(scores))
    assert out.shape == (B, N) and out.dtype == scores.dtype
    assert bool(jnp.all(jnp.isfinite(out)))
    assert jnp.allclose(out, ref, rtol=5e-4, atol=1e-6), "mismatch vs reference (aligned 2D)"

    # 2) Unaligned shape exercising the padding + masking path: 6 x 200 -> padded to 8 x 256.
    Bu, Nu = 6, 200
    scores_u = 0.5 * jax.random.normal(jax.random.PRNGKey(2), (Bu, Nu), jnp.float32)
    ref_u = _sinkhorn_ref(scores_u, eps=0.05, niters=3)
    out_u = jax.block_until_ready(sinkhorn_knopp_pallas(scores_u, eps=0.05, niters=3))
    assert out_u.shape == (Bu, Nu)
    assert bool(jnp.all(jnp.isfinite(out_u)))
    assert jnp.allclose(out_u, ref_u, rtol=5e-4, atol=1e-6), "mismatch vs reference (padded path)"

    # 3) Stacked-problem path: leading grid axis, parallel across TCs on v7x.
    G = 2
    scores3 = 0.5 * jax.random.normal(jax.random.PRNGKey(1), (G, B, N), jnp.float32)
    refs3 = [_sinkhorn_ref(scores3[gi], eps=0.05, niters=3) for gi in range(G)]
    out3 = jax.block_until_ready(sinkhorn_knopp_pallas(scores3, eps=0.05, niters=3))
    assert out3.shape == (G, B, N)
    for gi in range(G):
        assert jnp.allclose(out3[gi], refs3[gi], rtol=5e-4, atol=1e-6), "mismatch (stacked path)"

    # 4) niters == 0 degenerate path (pure row normalization).
    ref0 = _sinkhorn_ref(scores, eps=0.05, niters=0)
    out0 = jax.block_until_ready(sinkhorn_knopp_pallas(scores, eps=0.05, niters=0))
    assert jnp.allclose(out0, ref0, rtol=5e-4, atol=1e-6), "mismatch vs reference (niters=0)"

    print("KERNEL_OK")
</pallas_src>

<mosaic_0001>
module attributes {stable_mosaic.version = 11 : i64} {
  func.func @_sinkhorn_kernel(%arg0: i32, %arg1: memref<1x8x128xf32, #tpu.memory_space<vmem>>, %arg2: memref<1x8x128xf32, #tpu.memory_space<vmem>>, %arg3: memref<8x128xf32, #tpu.memory_space<vmem>>) attributes {dimension_semantics = [#tpu.dimension_semantics<parallel>], iteration_bounds = array<i64: 1>, scalar_prefetch = 0 : i64, scratch_operands = 1 : i64, tpu.core_type = #tpu.core_type<tc>, window_params = [{transform_indices = @transform_0, window_bounds = array<i64: 1, 8, 128>}, {transform_indices = @transform_1, window_bounds = array<i64: 1, 8, 128>}]} {
    %c0 = arith.constant 0 : index
    %c0_0 = arith.constant 0 : index
    %c0_1 = arith.constant 0 : index
    %0 = vector.load %arg1[%c0, %c0_0, %c0_1] : memref<1x8x128xf32, #tpu.memory_space<vmem>>, vector<1x8x128xf32>
    %1 = vector.shape_cast %0 : vector<1x8x128xf32> to vector<8x128xf32>
    %cst = arith.constant dense<0xFF800000> : vector<128xf32>
    %2 = vector.multi_reduction <maximumf>, %1, %cst [0] : vector<8x128xf32> to vector<128xf32>
    %3 = vector.shape_cast %2 : vector<128xf32> to vector<1x128xf32>
    %4 = vector.broadcast %3 : vector<1x128xf32> to vector<8x128xf32>
    %5 = arith.subf %1, %4 : vector<8x128xf32>
    %cst_2 = arith.constant 2.000000e+01 : f32
    %6 = vector.broadcast %cst_2 : f32 to vector<8x128xf32>
    %7 = arith.mulf %5, %6 : vector<8x128xf32>
    %8 = math.exp %7 : vector<8x128xf32>
    %c0_3 = arith.constant 0 : index
    %c0_4 = arith.constant 0 : index
    %9 = vector.load %arg3[%c0_3, %c0_4] : memref<8x128xf32, #tpu.memory_space<vmem>>, vector<8x128xf32>
    tpu.vector_store %arg3[%c0_3, %c0_4], %8 {strides = array<i32>} : memref<8x128xf32, #tpu.memory_space<vmem>>, vector<8x128xf32>,
    %cst_5 = arith.constant 1.000000e+00 : f32
    %10 = vector.broadcast %cst_5 : f32 to vector<1x8xf32>
    %c0_6 = arith.constant 0 : index
    %c0_7 = arith.constant 0 : index
    %11 = vector.load %arg3[%c0_6, %c0_7] : memref<8x128xf32, #tpu.memory_space<vmem>>, vector<8x128xf32>
    %cst_8 = arith.constant dense<0.000000e+00> : vector<1x128xf32>
    %12 = tpu.matmul %10, %11, %cst_8 {dimension_numbers = #tpu.dot_dimension_numbers<[1], [0], [0], [1], [0, 0, 1, 1], [], []>, precision = #tpu.contract_precision<fp32>} : vector<1x8xf32>, vector<8x128xf32>, vector<1x128xf32> -> vector<1x128xf32>
    %cst_9 = arith.constant 1.17549435E-38 : f32
    %13 = vector.broadcast %cst_9 : f32 to vector<1x128xf32>
    %14 = arith.maximumf %12, %13 : vector<1x128xf32>
    %15 = tpu.reciprocal %14 : vector<1x128xf32> -> vector<1x128xf32>
    %cst_10 = arith.constant 7.812500e-03 : f32
    %16 = vector.broadcast %cst_10 : f32 to vector<1x128xf32>
    %17 = arith.mulf %16, %15 : vector<1x128xf32>
    %c0_11 = arith.constant 0 : index
    %c0_12 = arith.constant 0 : index
    %18 = vector.load %arg3[%c0_11, %c0_12] : memref<8x128xf32, #tpu.memory_space<vmem>>, vector<8x128xf32>
    %cst_13 = arith.constant dense<0.000000e+00> : vector<1x8xf32>
    %19 = tpu.matmul %17, %18, %cst_13 {dimension_numbers = #tpu.dot_dimension_numbers<[1], [1], [0], [0], [0, 0, 1, 0], [], []>, precision = #tpu.contract_precision<fp32>} : vector<1x128xf32>, vector<8x128xf32>, vector<1x8xf32> -> vector<1x8xf32>
    %cst_14 = arith.constant 1.17549435E-38 : f32
    %20 = vector.broadcast %cst_14 : f32 to vector<1x8xf32>
    %21 = arith.maximumf %19, %20 : vector<1x8xf32>
    %22 = tpu.reciprocal %21 : vector<1x8xf32> -> vector<1x8xf32>
    %cst_15 = arith.constant 1.250000e-01 : f32
    %23 = vector.broadcast %cst_15 : f32 to vector<1x8xf32>
    %24 = arith.mulf %23, %22 : vector<1x8xf32>
    %c0_16 = arith.constant 0 : index
    %c0_17 = arith.constant 0 : index
    %25 = vector.load %arg3[%c0_16, %c0_17] : memref<8x128xf32, #tpu.memory_space<vmem>>, vector<8x128xf32>
    %cst_18 = arith.constant dense<0.000000e+00> : vector<1x128xf32>
    %26 = tpu.matmul %24, %25, %cst_18 {dimension_numbers = #tpu.dot_dimension_numbers<[1], [0], [0], [1], [0, 0, 1, 1], [], []>, precision = #tpu.contract_precision<fp32>} : vector<1x8xf32>, vector<8x128xf32>, vector<1x128xf32> -> vector<1x128xf32>
    %cst_19 = arith.constant 1.17549435E-38 : f32
    %27 = vector.broadcast %cst_19 : f32 to vector<1x128xf32>
    %28 = arith.maximumf %26, %27 : vector<1x128xf32>
    %29 = tpu.reciprocal %28 : vector<1x128xf32> -> vector<1x128xf32>
    %cst_20 = arith.constant 7.812500e-03 : f32
    %30 = vector.broadcast %cst_20 : f32 to vector<1x128xf32>
    %31 = arith.mulf %30, %29 : vector<1x128xf32>
    %c0_21 = arith.constant 0 : index
    %c0_22 = arith.constant 0 : index
    %32 = vector.load %arg3[%c0_21, %c0_22] : memref<8x128xf32, #tpu.memory_space<vmem>>, vector<8x128xf32>
    %cst_23 = arith.constant dense<0.000000e+00> : vector<1x8xf32>
    %33 = tpu.matmul %31, %32, %cst_23 {dimension_numbers = #tpu.dot_dimension_numbers<[1], [1], [0], [0], [0, 0, 1, 0], [], []>, precision = #tpu.contract_precision<fp32>} : vector<1x128xf32>, vector<8x128xf32>, vector<1x8xf32> -> vector<1x8xf32>
    %cst_24 = arith.constant 1.17549435E-38 : f32
    %34 = vector.broadcast %cst_24 : f32 to vector<1x8xf32>
    %35 = arith.maximumf %33, %34 : vector<1x8xf32>
    %36 = tpu.reciprocal %35 : vector<1x8xf32> -> vector<1x8xf32>
    %cst_25 = arith.constant 1.250000e-01 : f32
    %37 = vector.broadcast %cst_25 : f32 to vector<1x8xf32>
    %38 = arith.mulf %37, %36 : vector<1x8xf32>
    %c0_26 = arith.constant 0 : index
    %c0_27 = arith.constant 0 : index
    %39 = vector.load %arg3[%c0_26, %c0_27] : memref<8x128xf32, #tpu.memory_space<vmem>>, vector<8x128xf32>
    %cst_28 = arith.constant dense<0.000000e+00> : vector<1x128xf32>
    %40 = tpu.matmul %38, %39, %cst_28 {dimension_numbers = #tpu.dot_dimension_numbers<[1], [0], [0], [1], [0, 0, 1, 1], [], []>, precision = #tpu.contract_precision<fp32>} : vector<1x8xf32>, vector<8x128xf32>, vector<1x128xf32> -> vector<1x128xf32>
    %cst_29 = arith.constant 1.17549435E-38 : f32
    %41 = vector.broadcast %cst_29 : f32 to vector<1x128xf32>
    %42 = arith.maximumf %40, %41 : vector<1x128xf32>
    %43 = tpu.reciprocal %42 : vector<1x128xf32> -> vector<1x128xf32>
    %cst_30 = arith.constant 7.812500e-03 : f32
    %44 = vector.broadcast %cst_30 : f32 to vector<1x128xf32>
    %45 = arith.mulf %44, %43 : vector<1x128xf32>
    %c0_31 = arith.constant 0 : index
    %c0_32 = arith.constant 0 : index
    %46 = vector.load %arg3[%c0_31, %c0_32] : memref<8x128xf32, #tpu.memory_space<vmem>>, vector<8x128xf32>
    %cst_33 = arith.constant dense<0.000000e+00> : vector<8x1xf32>
    %47 = tpu.matmul %46, %45, %cst_33 {dimension_numbers = #tpu.dot_dimension_numbers<[1], [1], [0], [0], [0, 0, 1, 0], [], []>, precision = #tpu.contract_precision<fp32>} : vector<8x128xf32>, vector<1x128xf32>, vector<8x1xf32> -> vector<8x1xf32>
    %cst_34 = arith.constant 1.17549435E-38 : f32
    %48 = vector.broadcast %cst_34 : f32 to vector<8x1xf32>
    %49 = arith.maximumf %47, %48 : vector<8x1xf32>
    %c0_35 = arith.constant 0 : index
    %c0_36 = arith.constant 0 : index
    %50 = vector.load %arg3[%c0_35, %c0_36] : memref<8x128xf32, #tpu.memory_space<vmem>>, vector<8x128xf32>
    %51 = vector.broadcast %45 : vector<1x128xf32> to vector<8x128xf32>
    %52 = arith.mulf %50, %51 : vector<8x128xf32>
    %53 = tpu.reciprocal %49 : vector<8x1xf32> -> vector<8x1xf32>
    %54 = vector.broadcast %53 : vector<8x1xf32> to vector<8x128xf32>
    %55 = arith.mulf %52, %54 : vector<8x128xf32>
    %c0_37 = arith.constant 0 : index
    %c0_38 = arith.constant 0 : index
    %c0_39 = arith.constant 0 : index
    %56 = vector.load %arg2[%c0_37, %c0_38, %c0_39] : memref<1x8x128xf32, #tpu.memory_space<vmem>>, vector<1x8x128xf32>
    %57 = vector.shape_cast %56 : vector<1x8x128xf32> to vector<8x128xf32>
    %58 = vector.shape_cast %55 : vector<8x128xf32> to vector<1x8x128xf32>
    tpu.vector_store %arg2[%c0_37, %c0_38, %c0_39], %58 {strides = array<i32>} : memref<1x8x128xf32, #tpu.memory_space<vmem>>, vector<1x8x128xf32>,
    return
  }
  func.func @transform_0(%arg0: i32) -> (i32, i32, i32) {
    %c0_i32 = arith.constant 0 : i32
    %c0_i32_0 = arith.constant 0 : i32
    %c0_i32_1 = arith.constant 0 : i32
    return %arg0, %c0_i32, %c0_i32_0 : i32, i32, i32
  }
  func.func @transform_1(%arg0: i32) -> (i32, i32, i32) {
    %c0_i32 = arith.constant 0 : i32
    %c0_i32_0 = arith.constant 0 : i32
    %c0_i32_1 = arith.constant 0 : i32
    return %arg0, %c0_i32, %c0_i32_0 : i32, i32, i32
  }
}

</mosaic_0001>

<llo_original>
// kernel: tpu_custom_call.1
$region0: #{tpu_custom_call.1}
  #allocation0 [shape = 'u32[]', space=smem, size = 0x4, offset = 0x4, fixed_abs, tag = 'smem constant byte address 0x4 - core index']
  #allocation1 [shape = 'u32[144,128]{1,0:T(1,128)}', space=vmem, size = 0x12000, scoped, tag = 'internal scratch']
  #allocation2 [shape = 'f32[8,128]{1,0:T(8,128)}', space=vmem, size = 0x1000, scoped, tag = 'scratch operand']
  %s0 = inlined_call_operand.hbm [shape: f32[1,8,128], index: 0, kind: input, shape index: {}, may-alias: {0,1}]
  %s1 = inlined_call_operand.hbm [shape: f32[1,8,128], index: 1, kind: output, shape index: {}, may-alias: {0,1}]
  %s2 = sld [smem:[#allocation0]]
  $region18: #{tpu_custom_call.1} parent=0
    _
  %s4 = ssub.s32 1, %s2
  %s5 = scalar_select 0, %s4, %s2
  $region1: #{tpu_custom_call.1} parent=0
    #allocation3 [shape = 'u8[4096]{0}', space=vmem, size = 0x1000, scoped, tag = 'input window, operand 0, single buffered']
    #allocation4 [shape = 's32[1]{0}', space=sflag, size = 0x4, scoped, tag = 'scoped memory for tpu_custom_call.1']
    #allocation5 [shape = 's32[1]{0}', space=sflag, size = 0x4, scoped, tag = 'scoped memory for tpu_custom_call.1']
    #allocation6 [shape = 'u8[4096]{0}', space=vmem, size = 0x1000, scoped, tag = 'output window, operand 0, single buffered']
    %6 = vsyncpa [#allocation4], 0
    %7 = vsyncpa [#allocation5], 0
    // Predicated region
    $region2: #{tpu_custom_call.1} parent=1 // pred_check
      _
    $region3: #{tpu_custom_call.1} parent=1 // pred_check_branch
      %9 = sbr.rel (0) target = $region5
    $region4: #{tpu_custom_call.1} parent=1 // pred_region
      %s11 = ssub.s32 128, 128
      %12 = vsyncadd [#allocation4], %s11
      %s14 = sshll.u32 [#allocation3], 4
      %s15 = int_to_ptr.vmem [resolvable:$true] %s14
      %17 = dma.hbm_to_vmem [thread:$0]  %s0, 128, %s15, [#allocation4]
    $region5: #{tpu_custom_call.1} parent=1 // pred_fallthru
      _
    // Predicated region
    $region6: #{tpu_custom_call.1} parent=1 // pred_check
      _
    $region7: #{tpu_custom_call.1} parent=1 // pred_check_branch
      %19 = sbr.rel (0) target = $region9
    $region8: #{tpu_custom_call.1} parent=1 // pred_region
      %20 = dma.done [#allocation4], 128
    $region9: #{tpu_custom_call.1} parent=1 // pred_fallthru
      _
    %v21 = vld [vmem:[#allocation3] sm:$0xff]
    %v22 = vrot.slane %v21, 4
    %v23 = vmax.f32 %v21, %v22
    %v24 = vrot.slane %v23, 2
    %v25 = vmax.f32 %v23, %v24
    %v26 = vrot.slane %v25, 1
    %v27 = vmax.f32 %v25, %v26
    %v28 = vsub.f32 %v21, %v27
    %v29 = vmul.f32 %v28, 20.0
    %v30 = vmul.f32 %v29, 1.442695
    %v31 = vpow.pop %v30
    %32 = vst [vmem:[#allocation2] sm:$0xff] %v31
    %v33 = vld [vmem:[#allocation2] sm:$0xff]
    %vm34 = vcmask 64512
    %v36 = vsel %vm34, 1.0, 0
    %38 = vmatprep.subr.mxu0 0.0
    %v39 = vand.u32 %v33, 4294901760
    %40 = vmatpush1.msra.mxu0 %v39
    %41 = vmatprep.subr.mxu0 0.0
    %42 = vmatpush1.msra.mxu0 0.0
    %43 = vmatprep.subr.mxu0 0.0
    %44 = vmatpush1.msra.mxu0 0.0
    %45 = vmatprep.subr.mxu0 0.0
    %46 = vmatpush1.msra.mxu0 0.0
    %47 = vmatprep.subr.mxu0 0.0
    %48 = vmatpush1.msra.mxu0 0.0
    %49 = vmatprep.subr.mxu0 0.0
    %50 = vmatpush1.msra.mxu0 0.0
    %51 = vmatprep.subr.mxu0 0.0
    %52 = vmatpush1.msra.mxu0 0.0
    %53 = vmatprep.subr.mxu0 0.0
    %54 = vmatpush1.msra.mxu0 0.0
    %55 = vmatprep.subr.mxu0 0.0
    %56 = vmatpush1.msra.mxu0 0.0
    %57 = vmatprep.subr.mxu0 0.0
    %58 = vmatpush1.msra.mxu0 0.0
    %59 = vmatprep.subr.mxu0 0.0
    %60 = vmatpush1.msra.mxu0 0.0
    %61 = vmatprep.subr.mxu0 0.0
    %62 = vmatpush1.msra.mxu0 0.0
    %63 = vmatprep.subr.mxu0 0.0
    %64 = vmatpush1.msra.mxu0 0.0
    %65 = vmatprep.subr.mxu0 0.0
    %66 = vmatpush1.msra.mxu0 0.0
    %67 = vmatprep.subr.mxu0 0.0
    %68 = vmatpush1.msra.mxu0 0.0
    %69 = vmatprep.subr.mxu0 0.0
    %70 = vmatpush1.msra.mxu0 0.0
    %71 = vmatprep.subr.mxu0 0.0
    %72 = vmatpush1.msra.mxu0 0.0
    %73 = vmatprep.subr.mxu0 0.0
    %74 = vmatpush1.msra.mxu0 0.0
    %75 = vmatprep.subr.mxu0 0.0
    %76 = vmatpush1.msra.mxu0 0.0
    %77 = vmatprep.subr.mxu0 0.0
    %78 = vmatpush1.msra.mxu0 0.0
    %79 = vmatprep.subr.mxu0 0.0
    %80 = vmatpush1.msra.mxu0 0.0
    %81 = vmatprep.subr.mxu0 0.0
    %82 = vmatpush1.msra.mxu0 0.0
    %83 = vmatprep.subr.mxu0 0.0
    %84 = vmatpush1.msra.mxu0 0.0
    %85 = vmatprep.subr.mxu0 0.0
    %86 = vmatpush1.msra.mxu0 0.0
    %87 = vmatprep.subr.mxu0 0.0
    %88 = vmatpush1.msra.mxu0 0.0
    %89 = vmatprep.subr.mxu0 0.0
    %90 = vmatpush1.msra.mxu0 0.0
    %91 = vmatprep.subr.mxu0 0.0
    %92 = vmatpush1.msra.mxu0 0.0
    %93 = vmatprep.subr.mxu0 0.0
    %94 = vmatpush1.msra.mxu0 0.0
    %95 = vmatprep.subr.mxu0 0.0
    %96 = vmatpush1.msra.mxu0 0.0
    %97 = vmatprep.subr.mxu0 0.0
    %98 = vmatpush1.msra.mxu0 0.0
    %99 = vmatprep.subr.mxu0 0.0
    %100 = vmatpush1.msra.mxu0 0.0
    %101 = vmatprep.subr.mxu0 0.0
    %102 = vmatpush1.msra.mxu0 0.0
    %103 = vmatprep.mubr.f32.mxu0 0.0
    %v104 = vand.u32 %v36, 4294901760
    %v105 = vsub.f32 %v36, %v104
    %v106 = vand.u32 %v105, 4294901760
    %v107 = vsub.f32 %v105, %v106
    %v108 = vand.u32 %v107, 4294901760
    %109 = vmatmul.mubr.f32.gmra.mrb[0].mxu0 %v108
    %v110 = vpop.f32.mrb[0].mxu0
    %v111 = vadd.f32 0.0, %v110
    %v112 = vpop.f32.mrb[0].mxu0
    %113 = vdwg.mxu0
    %114 = vmatprep.subr.mxu0 0.0
    %v115 = vand.u32 %v33, 4294901760
    %v116 = vsub.f32 %v33, %v115
    %v117 = vand.u32 %v116, 4294901760
    %v118 = vsub.f32 %v116, %v117
    %v119 = vand.u32 %v118, 4294901760
    %120 = vmatpush1.msra.mxu0 %v119
    %121 = vmatprep.subr.mxu0 0.0
    %122 = vmatpush1.msra.mxu0 0.0
    %123 = vmatprep.subr.mxu0 0.0
    %124 = vmatpush1.msra.mxu0 0.0
    %125 = vmatprep.subr.mxu0 0.0
    %126 = vmatpush1.msra.mxu0 0.0
    %127 = vmatprep.subr.mxu0 0.0
    %128 = vmatpush1.msra.mxu0 0.0
    %129 = vmatprep.subr.mxu0 0.0
    %130 = vmatpush1.msra.mxu0 0.0
    %131 = vmatprep.subr.mxu0 0.0
    %132 = vmatpush1.msra.mxu0 0.0
    %133 = vmatprep.subr.mxu0 0.0
    %134 = vmatpush1.msra.mxu0 0.0
    %135 = vmatprep.subr.mxu0 0.0
    %136 = vmatpush1.msra.mxu0 0.0
    %137 = vmatprep.subr.mxu0 0.0
    %138 = vmatpush1.msra.mxu0 0.0
    %139 = vmatprep.subr.mxu0 0.0
    %140 = vmatpush1.msra.mxu0 0.0
    %141 = vmatprep.subr.mxu0 0.0
    %142 = vmatpush1.msra.mxu0 0.0
    %143 = vmatprep.subr.mxu0 0.0
    %144 = vmatpush1.msra.mxu0 0.0
    %145 = vmatprep.subr.mxu0 0.0
    %146 = vmatpush1.msra.mxu0 0.0
    %147 = vmatprep.subr.mxu0 0.0
    %148 = vmatpush1.msra.mxu0 0.0
    %149 = vmatprep.subr.mxu0 0.0
    %150 = vmatpush1.msra.mxu0 0.0
    %151 = vmatprep.subr.mxu0 0.0
    %152 = vmatpush1.msra.mxu0 0.0
    %153 = vmatprep.subr.mxu0 0.0
    %154 = vmatpush1.msra.mxu0 0.0
    %155 = vmatprep.subr.mxu0 0.0
    %156 = vmatpush1.msra.mxu0 0.0
    %157 = vmatprep.subr.mxu0 0.0
    %158 = vmatpush1.msra.mxu0 0.0
    %159 = vmatprep.subr.mxu0 0.0
    %160 = vmatpush1.msra.mxu0 0.0
    %161 = vmatprep.subr.mxu0 0.0
    %162 = vmatpush1.msra.mxu0 0.0
    %163 = vmatprep.subr.mxu0 0.0
    %164 = vmatpush1.msra.mxu0 0.0
    %165 = vmatprep.subr.mxu0 0.0
    %166 = vmatpush1.msra.mxu0 0.0
    %167 = vmatprep.subr.mxu0 0.0
    %168 = vmatpush1.msra.mxu0 0.0
    %169 = vmatprep.subr.mxu0 0.0
    %170 = vmatpush1.msra.mxu0 0.0
    %171 = vmatprep.subr.mxu0 0.0
    %172 = vmatpush1.msra.mxu0 0.0
    %173 = vmatprep.subr.mxu0 0.0
    %174 = vmatpush1.msra.mxu0 0.0
    %175 = vmatprep.subr.mxu0 0.0
    %176 = vmatpush1.msra.mxu0 0.0
    %177 = vmatprep.subr.mxu0 0.0
    %178 = vmatpush1.msra.mxu0 0.0
    %179 = vmatprep.subr.mxu0 0.0
    %180 = vmatpush1.msra.mxu0 0.0
    %181 = vmatprep.subr.mxu0 0.0
    %182 = vmatpush1.msra.mxu0 0.0
    %183 = vmatprep.mubr.f32.mxu0 0.0
    %v184 = vand.u32 %v36, 4294901760
    %185 = vmatmul.mubr.f32.gmra.mrb[0].mxu0 %v184
    %v186 = vpop.f32.mrb[0].mxu0
    %v187 = vadd.f32 %v111, %v186
    %v188 = vpop.f32.mrb[0].mxu0
    %189 = vdwg.mxu0
    %190 = vmatprep.subr.mxu0 0.0
    %v191 = vand.u32 %v33, 4294901760
    %v192 = vsub.f32 %v33, %v191
    %193 = vmatpush1.msra.mxu0 %v192
    %194 = vmatprep.subr.mxu0 0.0
    %195 = vmatpush1.msra.mxu0 0.0
    %196 = vmatprep.subr.mxu0 0.0
    %197 = vmatpush1.msra.mxu0 0.0
    %198 = vmatprep.subr.mxu0 0.0
    %199 = vmatpush1.msra.mxu0 0.0
    %200 = vmatprep.subr.mxu0 0.0
    %201 = vmatpush1.msra.mxu0 0.0
    %202 = vmatprep.subr.mxu0 0.0
    %203 = vmatpush1.msra.mxu0 0.0
    %204 = vmatprep.subr.mxu0 0.0
    %205 = vmatpush1.msra.mxu0 0.0
    %206 = vmatprep.subr.mxu0 0.0
    %207 = vmatpush1.msra.mxu0 0.0
    %208 = vmatprep.subr.mxu0 0.0
    %209 = vmatpush1.msra.mxu0 0.0
    %210 = vmatprep.subr.mxu0 0.0
    %211 = vmatpush1.msra.mxu0 0.0
    %212 = vmatprep.subr.mxu0 0.0
    %213 = vmatpush1.msra.mxu0 0.0
    %214 = vmatprep.subr.mxu0 0.0
    %215 = vmatpush1.msra.mxu0 0.0
    %216 = vmatprep.subr.mxu0 0.0
    %217 = vmatpush1.msra.mxu0 0.0
    %218 = vmatprep.subr.mxu0 0.0
    %219 = vmatpush1.msra.mxu0 0.0
    %220 = vmatprep.subr.mxu0 0.0
    %221 = vmatpush1.msra.mxu0 0.0
    %222 = vmatprep.subr.mxu0 0.0
    %223 = vmatpush1.msra.mxu0 0.0
    %224 = vmatprep.subr.mxu0 0.0
    %225 = vmatpush1.msra.mxu0 0.0
    %226 = vmatprep.subr.mxu0 0.0
    %227 = vmatpush1.msra.mxu0 0.0
    %228 = vmatprep.subr.mxu0 0.0
    %229 = vmatpush1.msra.mxu0 0.0
    %230 = vmatprep.subr.mxu0 0.0
    %231 = vmatpush1.msra.mxu0 0.0
    %232 = vmatprep.subr.mxu0 0.0
    %233 = vmatpush1.msra.mxu0 0.0
    %234 = vmatprep.subr.mxu0 0.0
    %235 = vmatpush1.msra.mxu0 0.0
    %236 = vmatprep.subr.mxu0 0.0
    %237 = vmatpush1.msra.mxu0 0.0
    %238 = vmatprep.subr.mxu0 0.0
    %239 = vmatpush1.msra.mxu0 0.0
    %240 = vmatprep.subr.mxu0 0.0
    %241 = vmatpush1.msra.mxu0 0.0
    %242 = vmatprep.subr.mxu0 0.0
    %243 = vmatpush1.msra.mxu0 0.0
    %244 = vmatprep.subr.mxu0 0.0
    %245 = vmatpush1.msra.mxu0 0.0
    %246 = vmatprep.subr.mxu0 0.0
    %247 = vmatpush1.msra.mxu0 0.0
    %248 = vmatprep.subr.mxu0 0.0
    %249 = vmatpush1.msra.mxu0 0.0
    %250 = vmatprep.subr.mxu0 0.0
    %251 = vmatpush1.msra.mxu0 0.0
    %252 = vmatprep.subr.mxu0 0.0
    %253 = vmatpush1.msra.mxu0 0.0
    %254 = vmatprep.subr.mxu0 0.0
    %255 = vmatpush1.msra.mxu0 0.0
    %256 = vmatprep.mubr.f32.mxu0 0.0
    %v257 = vand.u32 %v36, 4294901760
    %v258 = vsub.f32 %v36, %v257
    %259 = vmatmul.mubr.f32.gmra.mrb[0].mxu0 %v258
    %v260 = vpop.f32.mrb[0].mxu0
    %v261 = vadd.f32 %v187, %v260
    %v262 = vpop.f32.mrb[0].mxu0
    %263 = vdwg.mxu0
    %264 = vmatprep.subr.mxu0 0.0
    %v265 = vand.u32 %v33, 4294901760
    %266 = vmatpush1.msra.mxu0 %v265
    %267 = vmatprep.subr.mxu0 0.0
    %268 = vmatpush1.msra.mxu0 0.0
    %269 = vmatprep.subr.mxu0 0.0
    %270 = vmatpush1.msra.mxu0 0.0
    %271 = vmatprep.subr.mxu0 0.0
    %272 = vmatpush1.msra.mxu0 0.0
    %273 = vmatprep.subr.mxu0 0.0
    %274 = vmatpush1.msra.mxu0 0.0
    %275 = vmatprep.subr.mxu0 0.0
    %276 = vmatpush1.msra.mxu0 0.0
    %277 = vmatprep.subr.mxu0 0.0
    %278 = vmatpush1.msra.mxu0 0.0
    %279 = vmatprep.subr.mxu0 0.0
    %280 = vmatpush1.msra.mxu0 0.0
    %281 = vmatprep.subr.mxu0 0.0
    %282 = vmatpush1.msra.mxu0 0.0
    %283 = vmatprep.subr.mxu0 0.0
    %284 = vmatpush1.msra.mxu0 0.0
    %285 = vmatprep.subr.mxu0 0.0
    %286 = vmatpush1.msra.mxu0 0.0
    %287 = vmatprep.subr.mxu0 0.0
    %288 = vmatpush1.msra.mxu0 0.0
    %289 = vmatprep.subr.mxu0 0.0
    %290 = vmatpush1.msra.mxu0 0.0
    %291 = vmatprep.subr.mxu0 0.0
    %292 = vmatpush1.msra.mxu0 0.0
    %293 = vmatprep.subr.mxu0 0.0
    %294 = vmatpush1.msra.mxu0 0.0
    %295 = vmatprep.subr.mxu0 0.0
    %296 = vmatpush1.msra.mxu0 0.0
    %297 = vmatprep.subr.mxu0 0.0
    %298 = vmatpush1.msra.mxu0 0.0
    %299 = vmatprep.subr.mxu0 0.0
    %300 = vmatpush1.msra.mxu0 0.0
    %301 = vmatprep.subr.mxu0 0.0
    %302 = vmatpush1.msra.mxu0 0.0
    %303 = vmatprep.subr.mxu0 0.0
    %304 = vmatpush1.msra.mxu0 0.0
    %305 = vmatprep.subr.mxu0 0.0
    %306 = vmatpush1.msra.mxu0 0.0
    %307 = vmatprep.subr.mxu0 0.0
    %308 = vmatpush1.msra.mxu0 0.0
    %309 = vmatprep.subr.mxu0 0.0
    %310 = vmatpush1.msra.mxu0 0.0
    %311 = vmatprep.subr.mxu0 0.0
    %312 = vmatpush1.msra.mxu0 0.0
    %313 = vmatprep.subr.mxu0 0.0
    %314 = vmatpush1.msra.mxu0 0.0
    %315 = vmatprep.subr.mxu0 0.0
    %316 = vmatpush1.msra.mxu0 0.0
    %317 = vmatprep.subr.mxu0 0.0
    %318 = vmatpush1.msra.mxu0 0.0
    %319 = vmatprep.subr.mxu0 0.0
    %320 = vmatpush1.msra.mxu0 0.0
    %321 = vmatprep.subr.mxu0 0.0
    %322 = vmatpush1.msra.mxu0 0.0
    %323 = vmatprep.subr.mxu0 0.0
    %324 = vmatpush1.msra.mxu0 0.0
    %325 = vmatprep.subr.mxu0 0.0
    %326 = vmatpush1.msra.mxu0 0.0
    %327 = vmatprep.subr.mxu0 0.0
    %328 = vmatpush1.msra.mxu0 0.0
    %329 = vmatprep.mubr.f32.mxu0 0.0
    %v330 = vand.u32 %v36, 4294901760
    %v331 = vsub.f32 %v36, %v330
    %v332 = vand.u32 %v331, 4294901760
    %333 = vmatmul.mubr.f32.gmra.mrb[0].mxu0 %v332
    %v334 = vpop.f32.mrb[0].mxu0
    %v335 = vadd.f32 %v261, %v334
    %v336 = vpop.f32.mrb[0].mxu0
    %337 = vdwg.mxu0
    %338 = vmatprep.subr.mxu0 0.0
    %v339 = vand.u32 %v33, 4294901760
    %v340 = vsub.f32 %v33, %v339
    %v341 = vand.u32 %v340, 4294901760
    %342 = vmatpush1.msra.mxu0 %v341
    %343 = vmatprep.subr.mxu0 0.0
    %344 = vmatpush1.msra.mxu0 0.0
    %345 = vmatprep.subr.mxu0 0.0
    %346 = vmatpush1.msra.mxu0 0.0
    %347 = vmatprep.subr.mxu0 0.0
    %348 = vmatpush1.msra.mxu0 0.0
    %349 = vmatprep.subr.mxu0 0.0
    %350 = vmatpush1.msra.mxu0 0.0
    %351 = vmatprep.subr.mxu0 0.0
    %352 = vmatpush1.msra.mxu0 0.0
    %353 = vmatprep.subr.mxu0 0.0
    %354 = vmatpush1.msra.mxu0 0.0
    %355 = vmatprep.subr.mxu0 0.0
    %356 = vmatpush1.msra.mxu0 0.0
    %357 = vmatprep.subr.mxu0 0.0
    %358 = vmatpush1.msra.mxu0 0.0
    %359 = vmatprep.subr.mxu0 0.0
    %360 = vmatpush1.msra.mxu0 0.0
    %361 = vmatprep.subr.mxu0 0.0
    %362 = vmatpush1.msra.mxu0 0.0
    %363 = vmatprep.subr.mxu0 0.0
    %364 = vmatpush1.msra.mxu0 0.0
    %365 = vmatprep.subr.mxu0 0.0
    %366 = vmatpush1.msra.mxu0 0.0
    %367 = vmatprep.subr.mxu0 0.0
    %368 = vmatpush1.msra.mxu0 0.0
    %369 = vmatprep.subr.mxu0 0.0
    %370 = vmatpush1.msra.mxu0 0.0
    %371 = vmatprep.subr.mxu0 0.0
    %372 = vmatpush1.msra.mxu0 0.0
    %373 = vmatprep.subr.mxu0 0.0
    %374 = vmatpush1.msra.mxu0 0.0
    %375 = vmatprep.subr.mxu0 0.0
    %376 = vmatpush1.msra.mxu0 0.0
    %377 = vmatprep.subr.mxu0 0.0
    %378 = vmatpush1.msra.mxu0 0.0
    %379 = vmatprep.subr.mxu0 0.0
    %380 = vmatpush1.msra.mxu0 0.0
    %381 = vmatprep.subr.mxu0 0.0
    %382 = vmatpush1.msra.mxu0 0.0
    %383 = vmatprep.subr.mxu0 0.0
    %384 = vmatpush1.msra.mxu0 0.0
    %385 = vmatprep.subr.mxu0 0.0
    %386 = vmatpush1.msra.mxu0 0.0
    %387 = vmatprep.subr.mxu0 0.0
    %388 = vmatpush1.msra.mxu0 0.0
    %389 = vmatprep.subr.mxu0 0.0
    %390 = vmatpush1.msra.mxu0 0.0
    %391 = vmatprep.subr.mxu0 0.0
    %392 = vmatpush1.msra.mxu0 0.0
    %393 = vmatprep.subr.mxu0 0.0
    %394 = vmatpush1.msra.mxu0 0.0
    %395 = vmatprep.subr.mxu0 0.0
    %396 = vmatpush1.msra.mxu0 0.0
    %397 = vmatprep.subr.mxu0 0.0
    %398 = vmatpush1.msra.mxu0 0.0
    %399 = vmatprep.subr.mxu0 0.0
    %400 = vmatpush1.msra.mxu0 0.0
    %401 = vmatprep.subr.mxu0 0.0
    %402 = vmatpush1.msra.mxu0 0.0
    %403 = vmatprep.subr.mxu0 0.0
    %404 = vmatpush1.msra.mxu0 0.0
    %405 = vmatprep.mubr.f32.mxu0 0.0
    %v406 = vand.u32 %v36, 4294901760
    %407 = vmatmul.mubr.f32.gmra.mrb[0].mxu0 %v406
    %v408 = vpop.f32.mrb[0].mxu0
    %v409 = vadd.f32 %v335, %v408
    %v410 = vpop.f32.mrb[0].mxu0
    %411 = vdwg.mxu0
    %412 = vmatprep.subr.mxu0 0.0
    %v413 = vand.u32 %v33, 4294901760
    %414 = vmatpush1.msra.mxu0 %v413
    %415 = vmatprep.subr.mxu0 0.0
    %416 = vmatpush1.msra.mxu0 0.0
    %417 = vmatprep.subr.mxu0 0.0
    %418 = vmatpush1.msra.mxu0 0.0
    %419 = vmatprep.subr.mxu0 0.0
    %420 = vmatpush1.msra.mxu0 0.0
    %421 = vmatprep.subr.mxu0 0.0
    %422 = vmatpush1.msra.mxu0 0.0
    %423 = vmatprep.subr.mxu0 0.0
    %424 = vmatpush1.msra.mxu0 0.0
    %425 = vmatprep.subr.mxu0 0.0
    %426 = vmatpush1.msra.mxu0 0.0
    %427 = vmatprep.subr.mxu0 0.0
    %428 = vmatpush1.msra.mxu0 0.0
    %429 = vmatprep.subr.mxu0 0.0
    %430 = vmatpush1.msra.mxu0 0.0
    %431 = vmatprep.subr.mxu0 0.0
    %432 = vmatpush1.msra.mxu0 0.0
    %433 = vmatprep.subr.mxu0 0.0
    %434 = vmatpush1.msra.mxu0 0.0
    %435 = vmatprep.subr.mxu0 0.0
    %436 = vmatpush1.msra.mxu0 0.0
    %437 = vmatprep.subr.mxu0 0.0
    %438 = vmatpush1.msra.mxu0 0.0
    %439 = vmatprep.subr.mxu0 0.0
    %440 = vmatpush1.msra.mxu0 0.0
    %441 = vmatprep.subr.mxu0 0.0
    %442 = vmatpush1.msra.mxu0 0.0
    %443 = vmatprep.subr.mxu0 0.0
    %444 = vmatpush1.msra.mxu0 0.0
    %445 = vmatprep.subr.mxu0 0.0
    %446 = vmatpush1.msra.mxu0 0.0
    %447 = vmatprep.subr.mxu0 0.0
    %448 = vmatpush1.msra.mxu0 0.0
    %449 = vmatprep.subr.mxu0 0.0
    %450 = vmatpush1.msra.mxu0 0.0
    %451 = vmatprep.subr.mxu0 0.0
    %452 = vmatpush1.msra.mxu0 0.0
    %453 = vmatprep.subr.mxu0 0.0
    %454 = vmatpush1.msra.mxu0 0.0
    %455 = vmatprep.subr.mxu0 0.0
    %456 = vmatpush1.msra.mxu0 0.0
    %457 = vmatprep.subr.mxu0 0.0
    %458 = vmatpush1.msra.mxu0 0.0
    %459 = vmatprep.subr.mxu0 0.0
    %460 = vmatpush1.msra.mxu0 0.0
    %461 = vmatprep.subr.mxu0 0.0
    %462 = vmatpush1.msra.mxu0 0.0
    %463 = vmatprep.subr.mxu0 0.0
    %464 = vmatpush1.msra.mxu0 0.0
    %465 = vmatprep.subr.mxu0 0.0
    %466 = vmatpush1.msra.mxu0 0.0
    %467 = vmatprep.subr.mxu0 0.0
    %468 = vmatpush1.msra.mxu0 0.0
    %469 = vmatprep.subr.mxu0 0.0
    %470 = vmatpush1.msra.mxu0 0.0
    %471 = vmatprep.subr.mxu0 0.0
    %472 = vmatpush1.msra.mxu0 0.0
    %473 = vmatprep.subr.mxu0 0.0
    %474 = vmatpush1.msra.mxu0 0.0
    %475 = vmatprep.subr.mxu0 0.0
    %476 = vmatpush1.msra.mxu0 0.0
    %477 = vmatprep.mubr.f32.mxu0 0.0
    %v478 = vand.u32 %v36, 4294901760
    %479 = vmatmul.mubr.f32.gmra.mrb[0].mxu0 %v478
    %v480 = vpop.f32.mrb[0].mxu0
    %v481 = vadd.f32 %v409, %v480
    %v482 = vpop.f32.mrb[0].mxu0
    %483 = vdwg.mxu0
    %v484 = vmax.f32 %v481, 1.1754944e-38
    %v485 = vrcp.pop %v484
    %v486 = vmul.f32 %v485, 0.0078125
    %487 = vmatprep.subr.mxu0 0.0
    %v488 = vand.u32 %v33, 4294901760
    %489 = vmatpush1.xpose.msra.mxu0 %v488
    %490 = vmatprep.subr.mxu0 0.0
    %491 = vmatpush1.xpose.msra.mxu0 0.0
    %492 = vmatprep.subr.mxu0 0.0
    %493 = vmatpush1.xpose.msra.mxu0 0.0
    %494 = vmatprep.subr.mxu0 0.0
    %495 = vmatpush1.xpose.msra.mxu0 0.0
    %496 = vmatprep.subr.mxu0 0.0
    %497 = vmatpush1.xpose.msra.mxu0 0.0
    %498 = vmatprep.subr.mxu0 0.0
    %499 = vmatpush1.xpose.msra.mxu0 0.0
    %500 = vmatprep.subr.mxu0 0.0
    %501 = vmatpush1.xpose.msra.mxu0 0.0
    %502 = vmatprep.subr.mxu0 0.0
    %503 = vmatpush1.xpose.msra.mxu0 0.0
    %504 = vmatprep.subr.mxu0 0.0
    %505 = vmatpush1.xpose.msra.mxu0 0.0
    %506 = vmatprep.subr.mxu0 0.0
    %507 = vmatpush1.xpose.msra.mxu0 0.0
    %508 = vmatprep.subr.mxu0 0.0
    %509 = vmatpush1.xpose.msra.mxu0 0.0
    %510 = vmatprep.subr.mxu0 0.0
    %511 = vmatpush1.xpose.msra.mxu0 0.0
    %512 = vmatprep.subr.mxu0 0.0
    %513 = vmatpush1.xpose.msra.mxu0 0.0
    %514 = vmatprep.subr.mxu0 0.0
    %515 = vmatpush1.xpose.msra.mxu0 0.0
    %516 = vmatprep.subr.mxu0 0.0
    %517 = vmatpush1.xpose.msra.mxu0 0.0
    %518 = vmatprep.subr.mxu0 0.0
    %519 = vmatpush1.xpose.msra.mxu0 0.0
    %520 = vmatprep.subr.mxu0 0.0
    %521 = vmatpush1.xpose.msra.mxu0 0.0
    %522 = vmatprep.subr.mxu0 0.0
    %523 = vmatpush1.xpose.msra.mxu0 0.0
    %524 = vmatprep.subr.mxu0 0.0
    %525 = vmatpush1.xpose.msra.mxu0 0.0
    %526 = vmatprep.subr.mxu0 0.0
    %527 = vmatpush1.xpose.msra.mxu0 0.0
    %528 = vmatprep.subr.mxu0 0.0
    %529 = vmatpush1.xpose.msra.mxu0 0.0
    %530 = vmatprep.subr.mxu0 0.0
    %531 = vmatpush1.xpose.msra.mxu0 0.0
    %532 = vmatprep.subr.mxu0 0.0
    %533 = vmatpush1.xpose.msra.mxu0 0.0
    %534 = vmatprep.subr.mxu0 0.0
    %535 = vmatpush1.xpose.msra.mxu0 0.0
    %536 = vmatprep.subr.mxu0 0.0
    %537 = vmatpush1.xpose.msra.mxu0 0.0
    %538 = vmatprep.subr.mxu0 0.0
    %539 = vmatpush1.xpose.msra.mxu0 0.0
    %540 = vmatprep.subr.mxu0 0.0
    %541 = vmatpush1.xpose.msra.mxu0 0.0
    %542 = vmatprep.subr.mxu0 0.0
    %543 = vmatpush1.xpose.msra.mxu0 0.0
    %544 = vmatprep.subr.mxu0 0.0
    %545 = vmatpush1.xpose.msra.mxu0 0.0
    %546 = vmatprep.subr.mxu0 0.0
    %547 = vmatpush1.xpose.msra.mxu0 0.0
    %548 = vmatprep.subr.mxu0 0.0
    %549 = vmatpush1.xpose.msra.mxu0 0.0
    %550 = vmatprep.subr.mxu0 0.0
    %551 = vmatpush1.xpose.msra.mxu0 0.0
    %552 = vmatprep.mubr.f32.mxu0 0.0
    %v553 = vand.u32 %v486, 4294901760
    %v554 = vsub.f32 %v486, %v553
    %v555 = vand.u32 %v554, 4294901760
    %v556 = vsub.f32 %v554, %v555
    %v557 = vand.u32 %v556, 4294901760
    %558 = vmatmul.mubr.f32.gmra.mrb[0].mxu0 %v557
    %v559 = vpop.f32.mrb[0].mxu0
    %v560 = vadd.f32 0.0, %v559
    %v561 = vpop.f32.mrb[0].mxu0
    %562 = vdwg.mxu0
    %563 = vmatprep.subr.mxu0 0.0
    %v564 = vand.u32 %v33, 4294901760
    %v565 = vsub.f32 %v33, %v564
    %v566 = vand.u32 %v565, 4294901760
    %v567 = vsub.f32 %v565, %v566
    %v568 = vand.u32 %v567, 4294901760
    %569 = vmatpush1.xpose.msra.mxu0 %v568
    %570 = vmatprep.subr.mxu0 0.0
    %571 = vmatpush1.xpose.msra.mxu0 0.0
    %572 = vmatprep.subr.mxu0 0.0
    %573 = vmatpush1.xpose.msra.mxu0 0.0
    %574 = vmatprep.subr.mxu0 0.0
    %575 = vmatpush1.xpose.msra.mxu0 0.0
    %576 = vmatprep.subr.mxu0 0.0
    %577 = vmatpush1.xpose.msra.mxu0 0.0
    %578 = vmatprep.subr.mxu0 0.0
    %579 = vmatpush1.xpose.msra.mxu0 0.0
    %580 = vmatprep.subr.mxu0 0.0
    %581 = vmatpush1.xpose.msra.mxu0 0.0
    %582 = vmatprep.subr.mxu0 0.0
    %583 = vmatpush1.xpose.msra.mxu0 0.0
    %584 = vmatprep.subr.mxu0 0.0
    %585 = vmatpush1.xpose.msra.mxu0 0.0
    %586 = vmatprep.subr.mxu0 0.0
    %587 = vmatpush1.xpose.msra.mxu0 0.0
    %588 = vmatprep.subr.mxu0 0.0
    %589 = vmatpush1.xpose.msra.mxu0 0.0
    %590 = vmatprep.subr.mxu0 0.0
    %591 = vmatpush1.xpose.msra.mxu0 0.0
    %592 = vmatprep.subr.mxu0 0.0
    %593 = vmatpush1.xpose.msra.mxu0 0.0
    %594 = vmatprep.subr.mxu0 0.0
    %595 = vmatpush1.xpose.msra.mxu0 0.0
    %596 = vmatprep.subr.mxu0 0.0
    %597 = vmatpush1.xpose.msra.mxu0 0.0
    %598 = vmatprep.subr.mxu0 0.0
    %599 = vmatpush1.xpose.msra.mxu0 0.0
    %600 = vmatprep.subr.mxu0 0.0
    %601 = vmatpush1.xpose.msra.mxu0 0.0
    %602 = vmatprep.subr.mxu0 0.0
    %603 = vmatpush1.xpose.msra.mxu0 0.0
    %604 = vmatprep.subr.mxu0 0.0
    %605 = vmatpush1.xpose.msra.mxu0 0.0
    %606 = vmatprep.subr.mxu0 0.0
    %607 = vmatpush1.xpose.msra.mxu0 0.0
    %608 = vmatprep.subr.mxu0 0.0
    %609 = vmatpush1.xpose.msra.mxu0 0.0
    %610 = vmatprep.subr.mxu0 0.0
    %611 = vmatpush1.xpose.msra.mxu0 0.0
    %612 = vmatprep.subr.mxu0 0.0
    %613 = vmatpush1.xpose.msra.mxu0 0.0
    %614 = vmatprep.subr.mxu0 0.0
    %615 = vmatpush1.xpose.msra.mxu0 0.0
    %616 = vmatprep.subr.mxu0 0.0
    %617 = vmatpush1.xpose.msra.mxu0 0.0
    %618 = vmatprep.subr.mxu0 0.0
    %619 = vmatpush1.xpose.msra.mxu0 0.0
    %620 = vmatprep.subr.mxu0 0.0
    %621 = vmatpush1.xpose.msra.mxu0 0.0
    %622 = vmatprep.subr.mxu0 0.0
    %623 = vmatpush1.xpose.msra.mxu0 0.0
    %624 = vmatprep.subr.mxu0 0.0
    %625 = vmatpush1.xpose.msra.mxu0 0.0
    %626 = vmatprep.subr.mxu0 0.0
    %627 = vmatpush1.xpose.msra.mxu0 0.0
    %628 = vmatprep.subr.mxu0 0.0
    %629 = vmatpush1.xpose.msra.mxu0 0.0
    %630 = vmatprep.subr.mxu0 0.0
    %631 = vmatpush1.xpose.msra.mxu0 0.0
    %632 = vmatprep.mubr.f32.mxu0 0.0
    %v633 = vand.u32 %v486, 4294901760
    %634 = vmatmul.mubr.f32.gmra.mrb[0].mxu0 %v633
    %v635 = vpop.f32.mrb[0].mxu0
    %v636 = vadd.f32 %v560, %v635
    %v637 = vpop.f32.mrb[0].mxu0
    %638 = vdwg.mxu0
    %639 = vmatprep.subr.mxu0 0.0
    %v640 = vand.u32 %v33, 4294901760
    %v641 = vsub.f32 %v33, %v640
    %642 = vmatpush1.xpose.msra.mxu0 %v641
    %643 = vmatprep.subr.mxu0 0.0
    %644 = vmatpush1.xpose.msra.mxu0 0.0
    %645 = vmatprep.subr.mxu0 0.0
    %646 = vmatpush1.xpose.msra.mxu0 0.0
    %647 = vmatprep.subr.mxu0 0.0
    %648 = vmatpush1.xpose.msra.mxu0 0.0
    %649 = vmatprep.subr.mxu0 0.0
    %650 = vmatpush1.xpose.msra.mxu0 0.0
    %651 = vmatprep.subr.mxu0 0.0
    %652 = vmatpush1.xpose.msra.mxu0 0.0
    %653 = vmatprep.subr.mxu0 0.0
    %654 = vmatpush1.xpose.msra.mxu0 0.0
    %655 = vmatprep.subr.mxu0 0.0
    %656 = vmatpush1.xpose.msra.mxu0 0.0
    %657 = vmatprep.subr.mxu0 0.0
    %658 = vmatpush1.xpose.msra.mxu0 0.0
    %659 = vmatprep.subr.mxu0 0.0
    %660 = vmatpush1.xpose.msra.mxu0 0.0
    %661 = vmatprep.subr.mxu0 0.0
    %662 = vmatpush1.xpose.msra.mxu0 0.0
    %663 = vmatprep.subr.mxu0 0.0
    %664 = vmatpush1.xpose.msra.mxu0 0.0
    %665 = vmatprep.subr.mxu0 0.0
    %666 = vmatpush1.xpose.msra.mxu0 0.0
    %667 = vmatprep.subr.mxu0 0.0
    %668 = vmatpush1.xpose.msra.mxu0 0.0
    %669 = vmatprep.subr.mxu0 0.0
    %670 = vmatpush1.xpose.msra.mxu0 0.0
    %671 = vmatprep.subr.mxu0 0.0
    %672 = vmatpush1.xpose.msra.mxu0 0.0
    %673 = vmatprep.subr.mxu0 0.0
    %674 = vmatpush1.xpose.msra.mxu0 0.0
    %675 = vmatprep.subr.mxu0 0.0
    %676 = vmatpush1.xpose.msra.mxu0 0.0
    %677 = vmatprep.subr.mxu0 0.0
    %678 = vmatpush1.xpose.msra.mxu0 0.0
    %679 = vmatprep.subr.mxu0 0.0
    %680 = vmatpush1.xpose.msra.mxu0 0.0
    %681 = vmatprep.subr.mxu0 0.0
    %682 = vmatpush1.xpose.msra.mxu0 0.0
    %683 = vmatprep.subr.mxu0 0.0
    %684 = vmatpush1.xpose.msra.mxu0 0.0
    %685 = vmatprep.subr.mxu0 0.0
    %686 = vmatpush1.xpose.msra.mxu0 0.0
    %687 = vmatprep.subr.mxu0 0.0
    %688 = vmatpush1.xpose.msra.mxu0 0.0
    %689 = vmatprep.subr.mxu0 0.0
    %690 = vmatpush1.xpose.msra.mxu0 0.0
    %691 = vmatprep.subr.mxu0 0.0
    %692 = vmatpush1.xpose.msra.mxu0 0.0
    %693 = vmatprep.subr.mxu0 0.0
    %694 = vmatpush1.xpose.msra.mxu0 0.0
    %695 = vmatprep.subr.mxu0 0.0
    %696 = vmatpush1.xpose.msra.mxu0 0.0
    %697 = vmatprep.subr.mxu0 0.0
    %698 = vmatpush1.xpose.msra.mxu0 0.0
    %699 = vmatprep.subr.mxu0 0.0
    %700 = vmatpush1.xpose.msra.mxu0 0.0
    %701 = vmatprep.subr.mxu0 0.0
    %702 = vmatpush1.xpose.msra.mxu0 0.0
    %703 = vmatprep.subr.mxu0 0.0
    %704 = vmatpush1.xpose.msra.mxu0 0.0
    %705 = vmatprep.mubr.f32.mxu0 0.0
    %v706 = vand.u32 %v486, 4294901760
    %v707 = vsub.f32 %v486, %v706
    %708 = vmatmul.mubr.f32.gmra.mrb[0].mxu0 %v707
    %v709 = vpop.f32.mrb[0].mxu0
    %v710 = vadd.f32 %v636, %v709
    %v711 = vpop.f32.mrb[0].mxu0
    %712 = vdwg.mxu0
    %713 = vmatprep.subr.mxu0 0.0
    %v714 = vand.u32 %v33, 4294901760
    %715 = vmatpush1.xpose.msra.mxu0 %v714
    %716 = vmatprep.subr.mxu0 0.0
    %717 = vmatpush1.xpose.msra.mxu0 0.0
    %718 = vmatprep.subr.mxu0 0.0
    %719 = vmatpush1.xpose.msra.mxu0 0.0
    %720 = vmatprep.subr.mxu0 0.0
    %721 = vmatpush1.xpose.msra.mxu0 0.0
    %722 = vmatprep.subr.mxu0 0.0
    %723 = vmatpush1.xpose.msra.mxu0 0.0
    %724 = vmatprep.subr.mxu0 0.0
    %725 = vmatpush1.xpose.msra.mxu0 0.0
    %726 = vmatprep.subr.mxu0 0.0
    %727 = vmatpush1.xpose.msra.mxu0 0.0
    %728 = vmatprep.subr.mxu0 0.0
    %729 = vmatpush1.xpose.msra.mxu0 0.0
    %730 = vmatprep.subr.mxu0 0.0
    %731 = vmatpush1.xpose.msra.mxu0 0.0
    %732 = vmatprep.subr.mxu0 0.0
    %733 = vmatpush1.xpose.msra.mxu0 0.0
    %734 = vmatprep.subr.mxu0 0.0
    %735 = vmatpush1.xpose.msra.mxu0 0.0
    %736 = vmatprep.subr.mxu0 0.0
    %737 = vmatpush1.xpose.msra.mxu0 0.0
    %738 = vmatprep.subr.mxu0 0.0
    %739 = vmatpush1.xpose.msra.mxu0 0.0
    %740 = vmatprep.subr.mxu0 0.0
    %741 = vmatpush1.xpose.msra.mxu0 0.0
    %742 = vmatprep.subr.mxu0 0.0
    %743 = vmatpush1.xpose.msra.mxu0 0.0
    %744 = vmatprep.subr.mxu0 0.0
    %745 = vmatpush1.xpose.msra.mxu0 0.0
    %746 = vmatprep.subr.mxu0 0.0
    %747 = vmatpush1.xpose.msra.mxu0 0.0
    %748 = vmatprep.subr.mxu0 0.0
    %749 = vmatpush1.xpose.msra.mxu0 0.0
    %750 = vmatprep.subr.mxu0 0.0
    %751 = vmatpush1.xpose.msra.mxu0 0.0
    %752 = vmatprep.subr.mxu0 0.0
    %753 = vmatpush1.xpose.msra.mxu0 0.0
    %754 = vmatprep.subr.mxu0 0.0
    %755 = vmatpush1.xpose.msra.mxu0 0.0
    %756 = vmatprep.subr.mxu0 0.0
    %757 = vmatpush1.xpose.msra.mxu0 0.0
    %758 = vmatprep.subr.mxu0 0.0
    %759 = vmatpush1.xpose.msra.mxu0 0.0
    %760 = vmatprep.subr.mxu0 0.0
    %761 = vmatpush1.xpose.msra.mxu0 0.0
    %762 = vmatprep.subr.mxu0 0.0
    %763 = vmatpush1.xpose.msra.mxu0 0.0
    %764 = vmatprep.subr.mxu0 0.0
    %765 = vmatpush1.xpose.msra.mxu0 0.0
    %766 = vmatprep.subr.mxu0 0.0
    %767 = vmatpush1.xpose.msra.mxu0 0.0
    %768 = vmatprep.subr.mxu0 0.0
    %769 = vmatpush1.xpose.msra.mxu0 0.0
    %770 = vmatprep.subr.mxu0 0.0
    %771 = vmatpush1.xpose.msra.mxu0 0.0
    %772 = vmatprep.subr.mxu0 0.0
    %773 = vmatpush1.xpose.msra.mxu0 0.0
    %774 = vmatprep.subr.mxu0 0.0
    %775 = vmatpush1.xpose.msra.mxu0 0.0
    %776 = vmatprep.subr.mxu0 0.0
    %777 = vmatpush1.xpose.msra.mxu0 0.0
    %778 = vmatprep.mubr.f32.mxu0 0.0
    %v779 = vand.u32 %v486, 4294901760
    %v780 = vsub.f32 %v486, %v779
    %v781 = vand.u32 %v780, 4294901760
    %782 = vmatmul.mubr.f32.gmra.mrb[0].mxu0 %v781
    %v783 = vpop.f32.mrb[0].mxu0
    %v784 = vadd.f32 %v710, %v783
    %v785 = vpop.f32.mrb[0].mxu0
    %786 = vdwg.mxu0
    %787 = vmatprep.subr.mxu0 0.0
    %v788 = vand.u32 %v33, 4294901760
    %v789 = vsub.f32 %v33, %v788
    %v790 = vand.u32 %v789, 4294901760
    %791 = vmatpush1.xpose.msra.mxu0 %v790
    %792 = vmatprep.subr.mxu0 0.0
    %793 = vmatpush1.xpose.msra.mxu0 0.0
    %794 = vmatprep.subr.mxu0 0.0
    %795 = vmatpush1.xpose.msra.mxu0 0.0
    %796 = vmatprep.subr.mxu0 0.0
    %797 = vmatpush1.xpose.msra.mxu0 0.0
    %798 = vmatprep.subr.mxu0 0.0
    %799 = vmatpush1.xpose.msra.mxu0 0.0
    %800 = vmatprep.subr.mxu0 0.0
    %801 = vmatpush1.xpose.msra.mxu0 0.0
    %802 = vmatprep.subr.mxu0 0.0
    %803 = vmatpush1.xpose.msra.mxu0 0.0
    %804 = vmatprep.subr.mxu0 0.0
    %805 = vmatpush1.xpose.msra.mxu0 0.0
    %806 = vmatprep.subr.mxu0 0.0
    %807 = vmatpush1.xpose.msra.mxu0 0.0
    %808 = vmatprep.subr.mxu0 0.0
    %809 = vmatpush1.xpose.msra.mxu0 0.0
    %810 = vmatprep.subr.mxu0 0.0
    %811 = vmatpush1.xpose.msra.mxu0 0.0
    %812 = vmatprep.subr.mxu0 0.0
    %813 = vmatpush1.xpose.msra.mxu0 0.0
    %814 = vmatprep.subr.mxu0 0.0
    %815 = vmatpush1.xpose.msra.mxu0 0.0
    %816 = vmatprep.subr.mxu0 0.0
    %817 = vmatpush1.xpose.msra.mxu0 0.0
    %818 = vmatprep.subr.mxu0 0.0
    %819 = vmatpush1.xpose.msra.mxu0 0.0
    %820 = vmatprep.subr.mxu0 0.0
    %821 = vmatpush1.xpose.msra.mxu0 0.0
    %822 = vmatprep.subr.mxu0 0.0
    %823 = vmatpush1.xpose.msra.mxu0 0.0
    %824 = vmatprep.subr.mxu0 0.0
    %825 = vmatpush1.xpose.msra.mxu0 0.0
    %826 = vmatprep.subr.mxu0 0.0
    %827 = vmatpush1.xpose.msra.mxu0 0.0
    %828 = vmatprep.subr.mxu0 0.0
    %829 = vmatpush1.xpose.msra.mxu0 0.0
    %830 = vmatprep.subr.mxu0 0.0
    %831 = vmatpush1.xpose.msra.mxu0 0.0
    %832 = vmatprep.subr.mxu0 0.0
    %833 = vmatpush1.xpose.msra.mxu0 0.0
    %834 = vmatprep.subr.mxu0 0.0
    %835 = vmatpush1.xpose.msra.mxu0 0.0
    %836 = vmatprep.subr.mxu0 0.0
    %837 = vmatpush1.xpose.msra.mxu0 0.0
    %838 = vmatprep.subr.mxu0 0.0
    %839 = vmatpush1.xpose.msra.mxu0 0.0
    %840 = vmatprep.subr.mxu0 0.0
    %841 = vmatpush1.xpose.msra.mxu0 0.0
    %842 = vmatprep.subr.mxu0 0.0
    %843 = vmatpush1.xpose.msra.mxu0 0.0
    %844 = vmatprep.subr.mxu0 0.0
    %845 = vmatpush1.xpose.msra.mxu0 0.0
    %846 = vmatprep.subr.mxu0 0.0
    %847 = vmatpush1.xpose.msra.mxu0 0.0
    %848 = vmatprep.subr.mxu0 0.0
    %849 = vmatpush1.xpose.msra.mxu0 0.0
    %850 = vmatprep.subr.mxu0 0.0
    %851 = vmatpush1.xpose.msra.mxu0 0.0
    %852 = vmatprep.subr.mxu0 0.0
    %853 = vmatpush1.xpose.msra.mxu0 0.0
    %854 = vmatprep.mubr.f32.mxu0 0.0
    %v855 = vand.u32 %v486, 4294901760
    %856 = vmatmul.mubr.f32.gmra.mrb[0].mxu0 %v855
    %v857 = vpop.f32.mrb[0].mxu0
    %v858 = vadd.f32 %v784, %v857
    %v859 = vpop.f32.mrb[0].mxu0
    %860 = vdwg.mxu0
    %861 = vmatprep.subr.mxu0 0.0
    %v862 = vand.u32 %v33, 4294901760
    %863 = vmatpush1.xpose.msra.mxu0 %v862
    %864 = vmatprep.subr.mxu0 0.0
    %865 = vmatpush1.xpose.msra.mxu0 0.0
    %866 = vmatprep.subr.mxu0 0.0
    %867 = vmatpush1.xpose.msra.mxu0 0.0
    %868 = vmatprep.subr.mxu0 0.0
    %869 = vmatpush1.xpose.msra.mxu0 0.0
    %870 = vmatprep.subr.mxu0 0.0
    %871 = vmatpush1.xpose.msra.mxu0 0.0
    %872 = vmatprep.subr.mxu0 0.0
    %873 = vmatpush1.xpose.msra.mxu0 0.0
    %874 = vmatprep.subr.mxu0 0.0
    %875 = vmatpush1.xpose.msra.mxu0 0.0
    %876 = vmatprep.subr.mxu0 0.0
    %877 = vmatpush1.xpose.msra.mxu0 0.0
    %878 = vmatprep.subr.mxu0 0.0
    %879 = vmatpush1.xpose.msra.mxu0 0.0
    %880 = vmatprep.subr.mxu0 0.0
    %881 = vmatpush1.xpose.msra.mxu0 0.0
    %882 = vmatprep.subr.mxu0 0.0
    %883 = vmatpush1.xpose.msra.mxu0 0.0
    %884 = vmatprep.subr.mxu0 0.0
    %885 = vmatpush1.xpose.msra.mxu0 0.0
    %886 = vmatprep.subr.mxu0 0.0
    %887 = vmatpush1.xpose.msra.mxu0 0.0
    %888 = vmatprep.subr.mxu0 0.0
    %889 = vmatpush1.xpose.msra.mxu0 0.0
    %890 = vmatprep.subr.mxu0 0.0
    %891 = vmatpush1.xpose.msra.mxu0 0.0
    %892 = vmatprep.subr.mxu0 0.0
    %893 = vmatpush1.xpose.msra.mxu0 0.0
    %894 = vmatprep.subr.mxu0 0.0
    %895 = vmatpush1.xpose.msra.mxu0 0.0
    %896 = vmatprep.subr.mxu0 0.0
    %897 = vmatpush1.xpose.msra.mxu0 0.0
    %898 = vmatprep.subr.mxu0 0.0
    %899 = vmatpush1.xpose.msra.mxu0 0.0
    %900 = vmatprep.subr.mxu0 0.0
    %901 = vmatpush1.xpose.msra.mxu0 0.0
    %902 = vmatprep.subr.mxu0 0.0
    %903 = vmatpush1.xpose.msra.mxu0 0.0
    %904 = vmatprep.subr.mxu0 0.0
    %905 = vmatpush1.xpose.msra.mxu0 0.0
    %906 = vmatprep.subr.mxu0 0.0
    %907 = vmatpush1.xpose.msra.mxu0 0.0
    %908 = vmatprep.subr.mxu0 0.0
    %909 = vmatpush1.xpose.msra.mxu0 0.0
    %910 = vmatprep.subr.mxu0 0.0
    %911 = vmatpush1.xpose.msra.mxu0 0.0
    %912 = vmatprep.subr.mxu0 0.0
    %913 = vmatpush1.xpose.msra.mxu0 0.0
    %914 = vmatprep.subr.mxu0 0.0
    %915 = vmatpush1.xpose.msra.mxu0 0.0
    %916 = vmatprep.subr.mxu0 0.0
    %917 = vmatpush1.xpose.msra.mxu0 0.0
    %918 = vmatprep.subr.mxu0 0.0
    %919 = vmatpush1.xpose.msra.mxu0 0.0
    %920 = vmatprep.subr.mxu0 0.0
    %921 = vmatpush1.xpose.msra.mxu0 0.0
    %922 = vmatprep.subr.mxu0 0.0
    %923 = vmatpush1.xpose.msra.mxu0 0.0
    %924 = vmatprep.subr.mxu0 0.0
    %925 = vmatpush1.xpose.msra.mxu0 0.0
    %926 = vmatprep.mubr.f32.mxu0 0.0
    %v927 = vand.u32 %v486, 4294901760
    %928 = vmatmul.mubr.f32.gmra.mrb[0].mxu0 %v927
    %v929 = vpop.f32.mrb[0].mxu0
    %v930 = vadd.f32 %v858, %v929
    %v931 = vpop.f32.mrb[0].mxu0
    %932 = vdwg.mxu0
    %v933 = vmax.f32 %v930, 1.1754944e-38
    %v934 = vrcp.pop %v933
    %v935 = vmul.f32 %v934, 0.125
    %v937 = vsel %vm34, %v935, 0
    %939 = vmatprep.subr.mxu0 0.0
    %v940 = vand.u32 %v33, 4294901760
    %941 = vmatpush1.msra.mxu0 %v940
    %942 = vmatprep.subr.mxu0 0.0
    %943 = vmatpush1.msra.mxu0 0.0
    %944 = vmatprep.subr.mxu0 0.0
    %945 = vmatpush1.msra.mxu0 0.0
    %946 = vmatprep.subr.mxu0 0.0
    %947 = vmatpush1.msra.mxu0 0.0
    %948 = vmatprep.subr.mxu0 0.0
    %949 = vmatpush1.msra.mxu0 0.0
    %950 = vmatprep.subr.mxu0 0.0
    %951 = vmatpush1.msra.mxu0 0.0
    %952 = vmatprep.subr.mxu0 0.0
    %953 = vmatpush1.msra.mxu0 0.0
    %954 = vmatprep.subr.mxu0 0.0
    %955 = vmatpush1.msra.mxu0 0.0
    %956 = vmatprep.subr.mxu0 0.0
    %957 = vmatpush1.msra.mxu0 0.0
    %958 = vmatprep.subr.mxu0 0.0
    %959 = vmatpush1.msra.mxu0 0.0
    %960 = vmatprep.subr.mxu0 0.0
    %961 = vmatpush1.msra.mxu0 0.0
    %962 = vmatprep.subr.mxu0 0.0
    %963 = vmatpush1.msra.mxu0 0.0
    %964 = vmatprep.subr.mxu0 0.0
    %965 = vmatpush1.msra.mxu0 0.0
    %966 = vmatprep.subr.mxu0 0.0
    %967 = vmatpush1.msra.mxu0 0.0
    %968 = vmatprep.subr.mxu0 0.0
    %969 = vmatpush1.msra.mxu0 0.0
    %970 = vmatprep.subr.mxu0 0.0
    %971 = vmatpush1.msra.mxu0 0.0
    %972 = vmatprep.subr.mxu0 0.0
    %973 = vmatpush1.msra.mxu0 0.0
    %974 = vmatprep.subr.mxu0 0.0
    %975 = vmatpush1.msra.mxu0 0.0
    %976 = vmatprep.subr.mxu0 0.0
    %977 = vmatpush1.msra.mxu0 0.0
    %978 = vmatprep.subr.mxu0 0.0
    %979 = vmatpush1.msra.mxu0 0.0
    %980 = vmatprep.subr.mxu0 0.0
    %981 = vmatpush1.msra.mxu0 0.0
    %982 = vmatprep.subr.mxu0 0.0
    %983 = vmatpush1.msra.mxu0 0.0
    %984 = vmatprep.subr.mxu0 0.0
    %985 = vmatpush1.msra.mxu0 0.0
    %986 = vmatprep.subr.mxu0 0.0
    %987 = vmatpush1.msra.mxu0 0.0
    %988 = vmatprep.subr.mxu0 0.0
    %989 = vmatpush1.msra.mxu0 0.0
    %990 = vmatprep.subr.mxu0 0.0
    %991 = vmatpush1.msra.mxu0 0.0
    %992 = vmatprep.subr.mxu0 0.0
    %993 = vmatpush1.msra.mxu0 0.0
    %994 = vmatprep.subr.mxu0 0.0
    %995 = vmatpush1.msra.mxu0 0.0
    %996 = vmatprep.subr.mxu0 0.0
    %997 = vmatpush1.msra.mxu0 0.0
    %998 = vmatprep.subr.mxu0 0.0
    %999 = vmatpush1.msra.mxu0 0.0
    %1000 = vmatprep.subr.mxu0 0.0
    %1001 = vmatpush1.msra.mxu0 0.0
    %1002 = vmatprep.subr.mxu0 0.0
    %1003 = vmatpush1.msra.mxu0 0.0
    %1004 = vmatprep.mubr.f32.mxu0 0.0
    %v1005 = vand.u32 %v937, 4294901760
    %v1006 = vsub.f32 %v937, %v1005
    %v1007 = vand.u32 %v1006, 4294901760
    %v1008 = vsub.f32 %v1006, %v1007
    %v1009 = vand.u32 %v1008, 4294901760
    %1010 = vmatmul.mubr.f32.gmra.mrb[0].mxu0 %v1009
    %v1011 = vpop.f32.mrb[0].mxu0
    %v1012 = vadd.f32 0.0, %v1011
    %v1013 = vpop.f32.mrb[0].mxu0
    %1014 = vdwg.mxu0
    %1015 = vmatprep.subr.mxu0 0.0
    %v1016 = vand.u32 %v33, 4294901760
    %v1017 = vsub.f32 %v33, %v1016
    %v1018 = vand.u32 %v1017, 4294901760
    %v1019 = vsub.f32 %v1017, %v1018
    %v1020 = vand.u32 %v1019, 4294901760
    %1021 = vmatpush1.msra.mxu0 %v1020
    %1022 = vmatprep.subr.mxu0 0.0
    %1023 = vmatpush1.msra.mxu0 0.0
    %1024 = vmatprep.subr.mxu0 0.0
    %1025 = vmatpush1.msra.mxu0 0.0
    %1026 = vmatprep.subr.mxu0 0.0
    %1027 = vmatpush1.msra.mxu0 0.0
    %1028 = vmatprep.subr.mxu0 0.0
    %1029 = vmatpush1.msra.mxu0 0.0
    %1030 = vmatprep.subr.mxu0 0.0
    %1031 = vmatpush1.msra.mxu0 0.0
    %1032 = vmatprep.subr.mxu0 0.0
    %1033 = vmatpush1.msra.mxu0 0.0
    %1034 = vmatprep.subr.mxu0 0.0
    %1035 = vmatpush1.msra.mxu0 0.0
    %1036 = vmatprep.subr.mxu0 0.0
    %1037 = vmatpush1.msra.mxu0 0.0
    %1038 = vmatprep.subr.mxu0 0.0
    %1039 = vmatpush1.msra.mxu0 0.0
    %1040 = vmatprep.subr.mxu0 0.0
    %1041 = vmatpush1.msra.mxu0 0.0
    %1042 = vmatprep.subr.mxu0 0.0
    %1043 = vmatpush1.msra.mxu0 0.0
    %1044 = vmatprep.subr.mxu0 0.0
    %1045 = vmatpush1.msra.mxu0 0.0
    %1046 = vmatprep.subr.mxu0 0.0
    %1047 = vmatpush1.msra.mxu0 0.0
    %1048 = vmatprep.subr.mxu0 0.0
    %1049 = vmatpush1.msra.mxu0 0.0
    %1050 = vmatprep.subr.mxu0 0.0
    %1051 = vmatpush1.msra.mxu0 0.0
    %1052 = vmatprep.subr.mxu0 0.0
    %1053 = vmatpush1.msra.mxu0 0.0
    %1054 = vmatprep.subr.mxu0 0.0
    %1055 = vmatpush1.msra.mxu0 0.0
    %1056 = vmatprep.subr.mxu0 0.0
    %1057 = vmatpush1.msra.mxu0 0.0
    %1058 = vmatprep.subr.mxu0 0.0
    %1059 = vmatpush1.msra.mxu0 0.0
    %1060 = vmatprep.subr.mxu0 0.0
    %1061 = vmatpush1.msra.mxu0 0.0
    %1062 = vmatprep.subr.mxu0 0.0
    %1063 = vmatpush1.msra.mxu0 0.0
    %1064 = vmatprep.subr.mxu0 0.0
    %1065 = vmatpush1.msra.mxu0 0.0
    %1066 = vmatprep.subr.mxu0 0.0
    %1067 = vmatpush1.msra.mxu0 0.0
    %1068 = vmatprep.subr.mxu0 0.0
    %1069 = vmatpush1.msra.mxu0 0.0
    %1070 = vmatprep.subr.mxu0 0.0
    %1071 = vmatpush1.msra.mxu0 0.0
    %1072 = vmatprep.subr.mxu0 0.0
    %1073 = vmatpush1.msra.mxu0 0.0
    %1074 = vmatprep.subr.mxu0 0.0
    %1075 = vmatpush1.msra.mxu0 0.0
    %1076 = vmatprep.subr.mxu0 0.0
    %1077 = vmatpush1.msra.mxu0 0.0
    %1078 = vmatprep.subr.mxu0 0.0
    %1079 = vmatpush1.msra.mxu0 0.0
    %1080 = vmatprep.subr.mxu0 0.0
    %1081 = vmatpush1.msra.mxu0 0.0
    %1082 = vmatprep.subr.mxu0 0.0
    %1083 = vmatpush1.msra.mxu0 0.0
    %1084 = vmatprep.mubr.f32.mxu0 0.0
    %v1085 = vand.u32 %v937, 4294901760
    %1086 = vmatmul.mubr.f32.gmra.mrb[0].mxu0 %v1085
    %v1087 = vpop.f32.mrb[0].mxu0
    %v1088 = vadd.f32 %v1012, %v1087
    %v1089 = vpop.f32.mrb[0].mxu0
    %1090 = vdwg.mxu0
    %1091 = vmatprep.subr.mxu0 0.0
    %v1092 = vand.u32 %v33, 4294901760
    %v1093 = vsub.f32 %v33, %v1092
    %1094 = vmatpush1.msra.mxu0 %v1093
    %1095 = vmatprep.subr.mxu0 0.0
    %1096 = vmatpush1.msra.mxu0 0.0
    %1097 = vmatprep.subr.mxu0 0.0
    %1098 = vmatpush1.msra.mxu0 0.0
    %1099 = vmatprep.subr.mxu0 0.0
    %1100 = vmatpush1.msra.mxu0 0.0
    %1101 = vmatprep.subr.mxu0 0.0
    %1102 = vmatpush1.msra.mxu0 0.0
    %1103 = vmatprep.subr.mxu0 0.0
    %1104 = vmatpush1.msra.mxu0 0.0
    %1105 = vmatprep.subr.mxu0 0.0
    %1106 = vmatpush1.msra.mxu0 0.0
    %1107 = vmatprep.subr.mxu0 0.0
    %1108 = vmatpush1.msra.mxu0 0.0
    %1109 = vmatprep.subr.mxu0 0.0
    %1110 = vmatpush1.msra.mxu0 0.0
    %1111 = vmatprep.subr.mxu0 0.0
    %1112 = vmatpush1.msra.mxu0 0.0
    %1113 = vmatprep.subr.mxu0 0.0
    %1114 = vmatpush1.msra.mxu0 0.0
    %1115 = vmatprep.subr.mxu0 0.0
    %1116 = vmatpush1.msra.mxu0 0.0
    %1117 = vmatprep.subr.mxu0 0.0
    %1118 = vmatpush1.msra.mxu0 0.0
    %1119 = vmatprep.subr.mxu0 0.0
    %1120 = vmatpush1.msra.mxu0 0.0
    %1121 = vmatprep.subr.mxu0 0.0
    %1122 = vmatpush1.msra.mxu0 0.0
    %1123 = vmatprep.subr.mxu0 0.0
    %1124 = vmatpush1.msra.mxu0 0.0
    %1125 = vmatprep.subr.mxu0 0.0
    %1126 = vmatpush1.msra.mxu0 0.0
    %1127 = vmatprep.subr.mxu0 0.0
    %1128 = vmatpush1.msra.mxu0 0.0
    %1129 = vmatprep.subr.mxu0 0.0
    %1130 = vmatpush1.msra.mxu0 0.0
    %1131 = vmatprep.subr.mxu0 0.0
    %1132 = vmatpush1.msra.mxu0 0.0
    %1133 = vmatprep.subr.mxu0 0.0
    %1134 = vmatpush1.msra.mxu0 0.0
    %1135 = vmatprep.subr.mxu0 0.0
    %1136 = vmatpush1.msra.mxu0 0.0
    %1137 = vmatprep.subr.mxu0 0.0
    %1138 = vmatpush1.msra.mxu0 0.0
    %1139 = vmatprep.subr.mxu0 0.0
    %1140 = vmatpush1.msra.mxu0 0.0
    %1141 = vmatprep.subr.mxu0 0.0
    %1142 = vmatpush1.msra.mxu0 0.0
    %1143 = vmatprep.subr.mxu0 0.0
    %1144 = vmatpush1.msra.mxu0 0.0
    %1145 = vmatprep.subr.mxu0 0.0
    %1146 = vmatpush1.msra.mxu0 0.0
    %1147 = vmatprep.subr.mxu0 0.0
    %1148 = vmatpush1.msra.mxu0 0.0
    %1149 = vmatprep.subr.mxu0 0.0
    %1150 = vmatpush1.msra.mxu0 0.0
    %1151 = vmatprep.subr.mxu0 0.0
    %1152 = vmatpush1.msra.mxu0 0.0
    %1153 = vmatprep.subr.mxu0 0.0
    %1154 = vmatpush1.msra.mxu0 0.0
    %1155 = vmatprep.subr.mxu0 0.0
    %1156 = vmatpush1.msra.mxu0 0.0
    %1157 = vmatprep.mubr.f32.mxu0 0.0
    %v1158 = vand.u32 %v937, 4294901760
    %v1159 = vsub.f32 %v937, %v1158
    %1160 = vmatmul.mubr.f32.gmra.mrb[0].mxu0 %v1159
    %v1161 = vpop.f32.mrb[0].mxu0
    %v1162 = vadd.f32 %v1088, %v1161
    %v1163 = vpop.f32.mrb[0].mxu0
    %1164 = vdwg.mxu0
    %1165 = vmatprep.subr.mxu0 0.0
    %v1166 = vand.u32 %v33, 4294901760
    %1167 = vmatpush1.msra.mxu0 %v1166
    %1168 = vmatprep.subr.mxu0 0.0
    %1169 = vmatpush1.msra.mxu0 0.0
    %1170 = vmatprep.subr.mxu0 0.0
    %1171 = vmatpush1.msra.mxu0 0.0
    %1172 = vmatprep.subr.mxu0 0.0
    %1173 = vmatpush1.msra.mxu0 0.0
    %1174 = vmatprep.subr.mxu0 0.0
    %1175 = vmatpush1.msra.mxu0 0.0
    %1176 = vmatprep.subr.mxu0 0.0
    %1177 = vmatpush1.msra.mxu0 0.0
    %1178 = vmatprep.subr.mxu0 0.0
    %1179 = vmatpush1.msra.mxu0 0.0
    %1180 = vmatprep.subr.mxu0 0.0
    %1181 = vmatpush1.msra.mxu0 0.0
    %1182 = vmatprep.subr.mxu0 0.0
    %1183 = vmatpush1.msra.mxu0 0.0
    %1184 = vmatprep.subr.mxu0 0.0
    %1185 = vmatpush1.msra.mxu0 0.0
    %1186 = vmatprep.subr.mxu0 0.0
    %1187 = vmatpush1.msra.mxu0 0.0
    %1188 = vmatprep.subr.mxu0 0.0
    %1189 = vmatpush1.msra.mxu0 0.0
    %1190 = vmatprep.subr.mxu0 0.0
    %1191 = vmatpush1.msra.mxu0 0.0
    %1192 = vmatprep.subr.mxu0 0.0
    %1193 = vmatpush1.msra.mxu0 0.0
    %1194 = vmatprep.subr.mxu0 0.0
    %1195 = vmatpush1.msra.mxu0 0.0
    %1196 = vmatprep.subr.mxu0 0.0
    %1197 = vmatpush1.msra.mxu0 0.0
    %1198 = vmatprep.subr.mxu0 0.0
    %1199 = vmatpush1.msra.mxu0 0.0
    %1200 = vmatprep.subr.mxu0 0.0
    %1201 = vmatpush1.msra.mxu0 0.0
    %1202 = vmatprep.subr.mxu0 0.0
    %1203 = vmatpush1.msra.mxu0 0.0
    %1204 = vmatprep.subr.mxu0 0.0
    %1205 = vmatpush1.msra.mxu0 0.0
    %1206 = vmatprep.subr.mxu0 0.0
    %1207 = vmatpush1.msra.mxu0 0.0
    %1208 = vmatprep.subr.mxu0 0.0
    %1209 = vmatpush1.msra.mxu0 0.0
    %1210 = vmatprep.subr.mxu0 0.0
    %1211 = vmatpush1.msra.mxu0 0.0
    %1212 = vmatprep.subr.mxu0 0.0
    %1213 = vmatpush1.msra.mxu0 0.0
    %1214 = vmatprep.subr.mxu0 0.0
    %1215 = vmatpush1.msra.mxu0 0.0
    %1216 = vmatprep.subr.mxu0 0.0
    %1217 = vmatpush1.msra.mxu0 0.0
    %1218 = vmatprep.subr.mxu0 0.0
    %1219 = vmatpush1.msra.mxu0 0.0
    %1220 = vmatprep.subr.mxu0 0.0
    %1221 = vmatpush1.msra.mxu0 0.0
    %1222 = vmatprep.subr.mxu0 0.0
    %1223 = vmatpush1.msra.mxu0 0.0
    %1224 = vmatprep.subr.mxu0 0.0
    %1225 = vmatpush1.msra.mxu0 0.0
    %1226 = vmatprep.subr.mxu0 0.0
    %1227 = vmatpush1.msra.mxu0 0.0
    %1228 = vmatprep.subr.mxu0 0.0
    %1229 = vmatpush1.msra.mxu0 0.0
    %1230 = vmatprep.mubr.f32.mxu0 0.0
    %v1231 = vand.u32 %v937, 4294901760
    %v1232 = vsub.f32 %v937, %v1231
    %v1233 = vand.u32 %v1232, 4294901760
    %1234 = vmatmul.mubr.f32.gmra.mrb[0].mxu0 %v1233
    %v1235 = vpop.f32.mrb[0].mxu0
    %v1236 = vadd.f32 %v1162, %v1235
    %v1237 = vpop.f32.mrb[0].mxu0
    %1238 = vdwg.mxu0
    %1239 = vmatprep.subr.mxu0 0.0
    %v1240 = vand.u32 %v33, 4294901760
    %v1241 = vsub.f32 %v33, %v1240
    %v1242 = vand.u32 %v1241, 4294901760
    %1243 = vmatpush1.msra.mxu0 %v1242
    %1244 = vmatprep.subr.mxu0 0.0
    %1245 = vmatpush1.msra.mxu0 0.0
    %1246 = vmatprep.subr.mxu0 0.0
    %1247 = vmatpush1.msra.mxu0 0.0
    %1248 = vmatprep.subr.mxu0 0.0
    %1249 = vmatpush1.msra.mxu0 0.0
    %1250 = vmatprep.subr.mxu0 0.0
    %1251 = vmatpush1.msra.mxu0 0.0
    %1252 = vmatprep.subr.mxu0 0.0
    %1253 = vmatpush1.msra.mxu0 0.0
    %1254 = vmatprep.subr.mxu0 0.0
    %1255 = vmatpush1.msra.mxu0 0.0
    %1256 = vmatprep.subr.mxu0 0.0
    %1257 = vmatpush1.msra.mxu0 0.0
    %1258 = vmatprep.subr.mxu0 0.0
    %1259 = vmatpush1.msra.mxu0 0.0
    %1260 = vmatprep.subr.mxu0 0.0
    %1261 = vmatpush1.msra.mxu0 0.0
    %1262 = vmatprep.subr.mxu0 0.0
    %1263 = vmatpush1.msra.mxu0 0.0
    %1264 = vmatprep.subr.mxu0 0.0
    %1265 = vmatpush1.msra.mxu0 0.0
    %1266 = vmatprep.subr.mxu0 0.0
    %1267 = vmatpush1.msra.mxu0 0.0
    %1268 = vmatprep.subr.mxu0 0.0
    %1269 = vmatpush1.msra.mxu0 0.0
    %1270 = vmatprep.subr.mxu0 0.0
    %1271 = vmatpush1.msra.mxu0 0.0
    %1272 = vmatprep.subr.mxu0 0.0
    %1273 = vmatpush1.msra.mxu0 0.0
    %1274 = vmatprep.subr.mxu0 0.0
    %1275 = vmatpush1.msra.mxu0 0.0
    %1276 = vmatprep.subr.mxu0 0.0
    %1277 = vmatpush1.msra.mxu0 0.0
    %1278 = vmatprep.subr.mxu0 0.0
    %1279 = vmatpush1.msra.mxu0 0.0
    %1280 = vmatprep.subr.mxu0 0.0
    %1281 = vmatpush1.msra.mxu0 0.0
    %1282 = vmatprep.subr.mxu0 0.0
    %1283 = vmatpush1.msra.mxu0 0.0
    %1284 = vmatprep.subr.mxu0 0.0
    %1285 = vmatpush1.msra.mxu0 0.0
    %1286 = vmatprep.subr.mxu0 0.0
    %1287 = vmatpush1.msra.mxu0 0.0
    %1288 = vmatprep.subr.mxu0 0.0
    %1289 = vmatpush1.msra.mxu0 0.0
    %1290 = vmatprep.subr.mxu0 0.0
    %1291 = vmatpush1.msra.mxu0 0.0
    %1292 = vmatprep.subr.mxu0 0.0
    %1293 = vmatpush1.msra.mxu0 0.0
    %1294 = vmatprep.subr.mxu0 0.0
    %1295 = vmatpush1.msra.mxu0 0.0
    %1296 = vmatprep.subr.mxu0 0.0
    %1297 = vmatpush1.msra.mxu0 0.0
    %1298 = vmatprep.subr.mxu0 0.0
    %1299 = vmatpush1.msra.mxu0 0.0
    %1300 = vmatprep.subr.mxu0 0.0
    %1301 = vmatpush1.msra.mxu0 0.0
    %1302 = vmatprep.subr.mxu0 0.0
    %1303 = vmatpush1.msra.mxu0 0.0
    %1304 = vmatprep.subr.mxu0 0.0
    %1305 = vmatpush1.msra.mxu0 0.0
    %1306 = vmatprep.mubr.f32.mxu0 0.0
    %v1307 = vand.u32 %v937, 4294901760
    %1308 = vmatmul.mubr.f32.gmra.mrb[0].mxu0 %v1307
    %v1309 = vpop.f32.mrb[0].mxu0
    %v1310 = vadd.f32 %v1236, %v1309
    %v1311 = vpop.f32.mrb[0].mxu0
    %1312 = vdwg.mxu0
    %1313 = vmatprep.subr.mxu0 0.0
    %v1314 = vand.u32 %v33, 4294901760
    %1315 = vmatpush1.msra.mxu0 %v1314
    %1316 = vmatprep.subr.mxu0 0.0
    %1317 = vmatpush1.msra.mxu0 0.0
    %1318 = vmatprep.subr.mxu0 0.0
    %1319 = vmatpush1.msra.mxu0 0.0
    %1320 = vmatprep.subr.mxu0 0.0
    %1321 = vmatpush1.msra.mxu0 0.0
    %1322 = vmatprep.subr.mxu0 0.0
    %1323 = vmatpush1.msra.mxu0 0.0
    %1324 = vmatprep.subr.mxu0 0.0
    %1325 = vmatpush1.msra.mxu0 0.0
    %1326 = vmatprep.subr.mxu0 0.0
    %1327 = vmatpush1.msra.mxu0 0.0
    %1328 = vmatprep.subr.mxu0 0.0
    %1329 = vmatpush1.msra.mxu0 0.0
    %1330 = vmatprep.subr.mxu0 0.0
    %1331 = vmatpush1.msra.mxu0 0.0
    %1332 = vmatprep.subr.mxu0 0.0
    %1333 = vmatpush1.msra.mxu0 0.0
    %1334 = vmatprep.subr.mxu0 0.0
    %1335 = vmatpush1.msra.mxu0 0.0
    %1336 = vmatprep.subr.mxu0 0.0
    %1337 = vmatpush1.msra.mxu0 0.0
    %1338 = vmatprep.subr.mxu0 0.0
    %1339 = vmatpush1.msra.mxu0 0.0
    %1340 = vmatprep.subr.mxu0 0.0
    %1341 = vmatpush1.msra.mxu0 0.0
    %1342 = vmatprep.subr.mxu0 0.0
    %1343 = vmatpush1.msra.mxu0 0.0
    %1344 = vmatprep.subr.mxu0 0.0
    %1345 = vmatpush1.msra.mxu0 0.0
    %1346 = vmatprep.subr.mxu0 0.0
    %1347 = vmatpush1.msra.mxu0 0.0
    %1348 = vmatprep.subr.mxu0 0.0
    %1349 = vmatpush1.msra.mxu0 0.0
    %1350 = vmatprep.subr.mxu0 0.0
    %1351 = vmatpush1.msra.mxu0 0.0
    %1352 = vmatprep.subr.mxu0 0.0
    %1353 = vmatpush1.msra.mxu0 0.0
    %1354 = vmatprep.subr.mxu0 0.0
    %1355 = vmatpush1.msra.mxu0 0.0
    %1356 = vmatprep.subr.mxu0 0.0
    %1357 = vmatpush1.msra.mxu0 0.0
    %1358 = vmatprep.subr.mxu0 0.0
    %1359 = vmatpush1.msra.mxu0 0.0
    %1360 = vmatprep.subr.mxu0 0.0
    %1361 = vmatpush1.msra.mxu0 0.0
    %1362 = vmatprep.subr.mxu0 0.0
    %1363 = vmatpush1.msra.mxu0 0.0
    %1364 = vmatprep.subr.mxu0 0.0
    %1365 = vmatpush1.msra.mxu0 0.0
    %1366 = vmatprep.subr.mxu0 0.0
    %1367 = vmatpush1.msra.mxu0 0.0
    %1368 = vmatprep.subr.mxu0 0.0
    %1369 = vmatpush1.msra.mxu0 0.0
    %1370 = vmatprep.subr.mxu0 0.0
    %1371 = vmatpush1.msra.mxu0 0.0
    %1372 = vmatprep.subr.mxu0 0.0
    %1373 = vmatpush1.msra.mxu0 0.0
    %1374 = vmatprep.subr.mxu0 0.0
    %1375 = vmatpush1.msra.mxu0 0.0
    %1376 = vmatprep.subr.mxu0 0.0
    %1377 = vmatpush1.msra.mxu0 0.0
    %1378 = vmatprep.mubr.f32.mxu0 0.0
    %v1379 = vand.u32 %v937, 4294901760
    %1380 = vmatmul.mubr.f32.gmra.mrb[0].mxu0 %v1379
    %v1381 = vpop.f32.mrb[0].mxu0
    %v1382 = vadd.f32 %v1310, %v1381
    %v1383 = vpop.f32.mrb[0].mxu0
    %1384 = vdwg.mxu0
    %v1385 = vmax.f32 %v1382, 1.1754944e-38
    %v1386 = vrcp.pop %v1385
    %v1387 = vmul.f32 %v1386, 0.0078125
    %1388 = vmatprep.subr.mxu0 0.0
    %v1389 = vand.u32 %v33, 4294901760
    %1390 = vmatpush1.xpose.msra.mxu0 %v1389
    %1391 = vmatprep.subr.mxu0 0.0
    %1392 = vmatpush1.xpose.msra.mxu0 0.0
    %1393 = vmatprep.subr.mxu0 0.0
    %1394 = vmatpush1.xpose.msra.mxu0 0.0
    %1395 = vmatprep.subr.mxu0 0.0
    %1396 = vmatpush1.xpose.msra.mxu0 0.0
    %1397 = vmatprep.subr.mxu0 0.0
    %1398 = vmatpush1.xpose.msra.mxu0 0.0
    %1399 = vmatprep.subr.mxu0 0.0
    %1400 = vmatpush1.xpose.msra.mxu0 0.0
    %1401 = vmatprep.subr.mxu0 0.0
    %1402 = vmatpush1.xpose.msra.mxu0 0.0
    %1403 = vmatprep.subr.mxu0 0.0
    %1404 = vmatpush1.xpose.msra.mxu0 0.0
    %1405 = vmatprep.subr.mxu0 0.0
    %1406 = vmatpush1.xpose.msra.mxu0 0.0
    %1407 = vmatprep.subr.mxu0 0.0
    %1408 = vmatpush1.xpose.msra.mxu0 0.0
    %1409 = vmatprep.subr.mxu0 0.0
    %1410 = vmatpush1.xpose.msra.mxu0 0.0
    %1411 = vmatprep.subr.mxu0 0.0
    %1412 = vmatpush1.xpose.msra.mxu0 0.0
    %1413 = vmatprep.subr.mxu0 0.0
    %1414 = vmatpush1.xpose.msra.mxu0 0.0
    %1415 = vmatprep.subr.mxu0 0.0
    %1416 = vmatpush1.xpose.msra.mxu0 0.0
    %1417 = vmatprep.subr.mxu0 0.0
    %1418 = vmatpush1.xpose.msra.mxu0 0.0
    %1419 = vmatprep.subr.mxu0 0.0
    %1420 = vmatpush1.xpose.msra.mxu0 0.0
    %1421 = vmatprep.subr.mxu0 0.0
    %1422 = vmatpush1.xpose.msra.mxu0 0.0
    %1423 = vmatprep.subr.mxu0 0.0
    %1424 = vmatpush1.xpose.msra.mxu0 0.0
    %1425 = vmatprep.subr.mxu0 0.0
    %1426 = vmatpush1.xpose.msra.mxu0 0.0
    %1427 = vmatprep.subr.mxu0 0.0
    %1428 = vmatpush1.xpose.msra.mxu0 0.0
    %1429 = vmatprep.subr.mxu0 0.0
    %1430 = vmatpush1.xpose.msra.mxu0 0.0
    %1431 = vmatprep.subr.mxu0 0.0
    %1432 = vmatpush1.xpose.msra.mxu0 0.0
    %1433 = vmatprep.subr.mxu0 0.0
    %1434 = vmatpush1.xpose.msra.mxu0 0.0
    %1435 = vmatprep.subr.mxu0 0.0
    %1436 = vmatpush1.xpose.msra.mxu0 0.0
    %1437 = vmatprep.subr.mxu0 0.0
    %1438 = vmatpush1.xpose.msra.mxu0 0.0
    %1439 = vmatprep.subr.mxu0 0.0
    %1440 = vmatpush1.xpose.msra.mxu0 0.0
    %1441 = vmatprep.subr.mxu0 0.0
    %1442 = vmatpush1.xpose.msra.mxu0 0.0
    %1443 = vmatprep.subr.mxu0 0.0
    %1444 = vmatpush1.xpose.msra.mxu0 0.0
    %1445 = vmatprep.subr.mxu0 0.0
    %1446 = vmatpush1.xpose.msra.mxu0 0.0
    %1447 = vmatprep.subr.mxu0 0.0
    %1448 = vmatpush1.xpose.msra.mxu0 0.0
    %1449 = vmatprep.subr.mxu0 0.0
    %1450 = vmatpush1.xpose.msra.mxu0 0.0
    %1451 = vmatprep.subr.mxu0 0.0
    %1452 = vmatpush1.xpose.msra.mxu0 0.0
    %1453 = vmatprep.mubr.f32.mxu0 0.0
    %v1454 = vand.u32 %v1387, 4294901760
    %v1455 = vsub.f32 %v1387, %v1454
    %v1456 = vand.u32 %v1455, 4294901760
    %v1457 = vsub.f32 %v1455, %v1456
    %v1458 = vand.u32 %v1457, 4294901760
    %1459 = vmatmul.mubr.f32.gmra.mrb[0].mxu0 %v1458
    %v1460 = vpop.f32.mrb[0].mxu0
    %v1461 = vadd.f32 0.0, %v1460
    %v1462 = vpop.f32.mrb[0].mxu0
    %1463 = vdwg.mxu0
    %1464 = vmatprep.subr.mxu0 0.0
    %v1465 = vand.u32 %v33, 4294901760
    %v1466 = vsub.f32 %v33, %v1465
    %v1467 = vand.u32 %v1466, 4294901760
    %v1468 = vsub.f32 %v1466, %v1467
    %v1469 = vand.u32 %v1468, 4294901760
    %1470 = vmatpush1.xpose.msra.mxu0 %v1469
    %1471 = vmatprep.subr.mxu0 0.0
    %1472 = vmatpush1.xpose.msra.mxu0 0.0
    %1473 = vmatprep.subr.mxu0 0.0
    %1474 = vmatpush1.xpose.msra.mxu0 0.0
    %1475 = vmatprep.subr.mxu0 0.0
    %1476 = vmatpush1.xpose.msra.mxu0 0.0
    %1477 = vmatprep.subr.mxu0 0.0
    %1478 = vmatpush1.xpose.msra.mxu0 0.0
    %1479 = vmatprep.subr.mxu0 0.0
    %1480 = vmatpush1.xpose.msra.mxu0 0.0
    %1481 = vmatprep.subr.mxu0 0.0
    %1482 = vmatpush1.xpose.msra.mxu0 0.0
    %1483 = vmatprep.subr.mxu0 0.0
    %1484 = vmatpush1.xpose.msra.mxu0 0.0
    %1485 = vmatprep.subr.mxu0 0.0
    %1486 = vmatpush1.xpose.msra.mxu0 0.0
    %1487 = vmatprep.subr.mxu0 0.0
    %1488 = vmatpush1.xpose.msra.mxu0 0.0
    %1489 = vmatprep.subr.mxu0 0.0
    %1490 = vmatpush1.xpose.msra.mxu0 0.0
    %1491 = vmatprep.subr.mxu0 0.0
    %1492 = vmatpush1.xpose.msra.mxu0 0.0
    %1493 = vmatprep.subr.mxu0 0.0
    %1494 = vmatpush1.xpose.msra.mxu0 0.0
    %1495 = vmatprep.subr.mxu0 0.0
    %1496 = vmatpush1.xpose.msra.mxu0 0.0
    %1497 = vmatprep.subr.mxu0 0.0
    %1498 = vmatpush1.xpose.msra.mxu0 0.0
    %1499 = vmatprep.subr.mxu0 0.0
    %1500 = vmatpush1.xpose.msra.mxu0 0.0
    %1501 = vmatprep.subr.mxu0 0.0
    %1502 = vmatpush1.xpose.msra.mxu0 0.0
    %1503 = vmatprep.subr.mxu0 0.0
    %1504 = vmatpush1.xpose.msra.mxu0 0.0
    %1505 = vmatprep.subr.mxu0 0.0
    %1506 = vmatpush1.xpose.msra.mxu0 0.0
    %1507 = vmatprep.subr.mxu0 0.0
    %1508 = vmatpush1.xpose.msra.mxu0 0.0
    %1509 = vmatprep.subr.mxu0 0.0
    %1510 = vmatpush1.xpose.msra.mxu0 0.0
    %1511 = vmatprep.subr.mxu0 0.0
    %1512 = vmatpush1.xpose.msra.mxu0 0.0
    %1513 = vmatprep.subr.mxu0 0.0
    %1514 = vmatpush1.xpose.msra.mxu0 0.0
    %1515 = vmatprep.subr.mxu0 0.0
    %1516 = vmatpush1.xpose.msra.mxu0 0.0
    %1517 = vmatprep.subr.mxu0 0.0
    %1518 = vmatpush1.xpose.msra.mxu0 0.0
    %1519 = vmatprep.subr.mxu0 0.0
    %1520 = vmatpush1.xpose.msra.mxu0 0.0
    %1521 = vmatprep.subr.mxu0 0.0
    %1522 = vmatpush1.xpose.msra.mxu0 0.0
    %1523 = vmatprep.subr.mxu0 0.0
    %1524 = vmatpush1.xpose.msra.mxu0 0.0
    %1525 = vmatprep.subr.mxu0 0.0
    %1526 = vmatpush1.xpose.msra.mxu0 0.0
    %1527 = vmatprep.subr.mxu0 0.0
    %1528 = vmatpush1.xpose.msra.mxu0 0.0
    %1529 = vmatprep.subr.mxu0 0.0
    %1530 = vmatpush1.xpose.msra.mxu0 0.0
    %1531 = vmatprep.subr.mxu0 0.0
    %1532 = vmatpush1.xpose.msra.mxu0 0.0
    %1533 = vmatprep.mubr.f32.mxu0 0.0
    %v1534 = vand.u32 %v1387, 4294901760
    %1535 = vmatmul.mubr.f32.gmra.mrb[0].mxu0 %v1534
    %v1536 = vpop.f32.mrb[0].mxu0
    %v1537 = vadd.f32 %v1461, %v1536
    %v1538 = vpop.f32.mrb[0].mxu0
    %1539 = vdwg.mxu0
    %1540 = vmatprep.subr.mxu0 0.0
    %v1541 = vand.u32 %v33, 4294901760
    %v1542 = vsub.f32 %v33, %v1541
    %1543 = vmatpush1.xpose.msra.mxu0 %v1542
    %1544 = vmatprep.subr.mxu0 0.0
    %1545 = vmatpush1.xpose.msra.mxu0 0.0
    %1546 = vmatprep.subr.mxu0 0.0
    %1547 = vmatpush1.xpose.msra.mxu0 0.0
    %1548 = vmatprep.subr.mxu0 0.0
    %1549 = vmatpush1.xpose.msra.mxu0 0.0
    %1550 = vmatprep.subr.mxu0 0.0
    %1551 = vmatpush1.xpose.msra.mxu0 0.0
    %1552 = vmatprep.subr.mxu0 0.0
    %1553 = vmatpush1.xpose.msra.mxu0 0.0
    %1554 = vmatprep.subr.mxu0 0.0
    %1555 = vmatpush1.xpose.msra.mxu0 0.0
    %1556 = vmatprep.subr.mxu0 0.0
    %1557 = vmatpush1.xpose.msra.mxu0 0.0
    %1558 = vmatprep.subr.mxu0 0.0
    %1559 = vmatpush1.xpose.msra.mxu0 0.0
    %1560 = vmatprep.subr.mxu0 0.0
    %1561 = vmatpush1.xpose.msra.mxu0 0.0
    %1562 = vmatprep.subr.mxu0 0.0
    %1563 = vmatpush1.xpose.msra.mxu0 0.0
    %1564 = vmatprep.subr.mxu0 0.0
    %1565 = vmatpush1.xpose.msra.mxu0 0.0
    %1566 = vmatprep.subr.mxu0 0.0
    %1567 = vmatpush1.xpose.msra.mxu0 0.0
    %1568 = vmatprep.subr.mxu0 0.0
    %1569 = vmatpush1.xpose.msra.mxu0 0.0
    %1570 = vmatprep.subr.mxu0 0.0
    %1571 = vmatpush1.xpose.msra.mxu0 0.0
    %1572 = vmatprep.subr.mxu0 0.0
    %1573 = vmatpush1.xpose.msra.mxu0 0.0
    %1574 = vmatprep.subr.mxu0 0.0
    %1575 = vmatpush1.xpose.msra.mxu0 0.0
    %1576 = vmatprep.subr.mxu0 0.0
    %1577 = vmatpush1.xpose.msra.mxu0 0.0
    %1578 = vmatprep.subr.mxu0 0.0
    %1579 = vmatpush1.xpose.msra.mxu0 0.0
    %1580 = vmatprep.subr.mxu0 0.0
    %1581 = vmatpush1.xpose.msra.mxu0 0.0
    %1582 = vmatprep.subr.mxu0 0.0
    %1583 = vmatpush1.xpose.msra.mxu0 0.0
    %1584 = vmatprep.subr.mxu0 0.0
    %1585 = vmatpush1.xpose.msra.mxu0 0.0
    %1586 = vmatprep.subr.mxu0 0.0
    %1587 = vmatpush1.xpose.msra.mxu0 0.0
    %1588 = vmatprep.subr.mxu0 0.0
    %1589 = vmatpush1.xpose.msra.mxu0 0.0
    %1590 = vmatprep.subr.mxu0 0.0
    %1591 = vmatpush1.xpose.msra.mxu0 0.0
    %1592 = vmatprep.subr.mxu0 0.0
    %1593 = vmatpush1.xpose.msra.mxu0 0.0
    %1594 = vmatprep.subr.mxu0 0.0
    %1595 = vmatpush1.xpose.msra.mxu0 0.0
    %1596 = vmatprep.subr.mxu0 0.0
    %1597 = vmatpush1.xpose.msra.mxu0 0.0
    %1598 = vmatprep.subr.mxu0 0.0
    %1599 = vmatpush1.xpose.msra.mxu0 0.0
    %1600 = vmatprep.subr.mxu0 0.0
    %1601 = vmatpush1.xpose.msra.mxu0 0.0
    %1602 = vmatprep.subr.mxu0 0.0
    %1603 = vmatpush1.xpose.msra.mxu0 0.0
    %1604 = vmatprep.subr.mxu0 0.0
    %1605 = vmatpush1.xpose.msra.mxu0 0.0
    %1606 = vmatprep.mubr.f32.mxu0 0.0
    %v1607 = vand.u32 %v1387, 4294901760
    %v1608 = vsub.f32 %v1387, %v1607
    %1609 = vmatmul.mubr.f32.gmra.mrb[0].mxu0 %v1608
    %v1610 = vpop.f32.mrb[0].mxu0
    %v1611 = vadd.f32 %v1537, %v1610
    %v1612 = vpop.f32.mrb[0].mxu0
    %1613 = vdwg.mxu0
    %1614 = vmatprep.subr.mxu0 0.0
    %v1615 = vand.u32 %v33, 4294901760
    %1616 = vmatpush1.xpose.msra.mxu0 %v1615
    %1617 = vmatprep.subr.mxu0 0.0
    %1618 = vmatpush1.xpose.msra.mxu0 0.0
    %1619 = vmatprep.subr.mxu0 0.0
    %1620 = vmatpush1.xpose.msra.mxu0 0.0
    %1621 = vmatprep.subr.mxu0 0.0
    %1622 = vmatpush1.xpose.msra.mxu0 0.0
    %1623 = vmatprep.subr.mxu0 0.0
    %1624 = vmatpush1.xpose.msra.mxu0 0.0
    %1625 = vmatprep.subr.mxu0 0.0
    %1626 = vmatpush1.xpose.msra.mxu0 0.0
    %1627 = vmatprep.subr.mxu0 0.0
    %1628 = vmatpush1.xpose.msra.mxu0 0.0
    %1629 = vmatprep.subr.mxu0 0.0
    %1630 = vmatpush1.xpose.msra.mxu0 0.0
    %1631 = vmatprep.subr.mxu0 0.0
    %1632 = vmatpush1.xpose.msra.mxu0 0.0
    %1633 = vmatprep.subr.mxu0 0.0
    %1634 = vmatpush1.xpose.msra.mxu0 0.0
    %1635 = vmatprep.subr.mxu0 0.0
    %1636 = vmatpush1.xpose.msra.mxu0 0.0
    %1637 = vmatprep.subr.mxu0 0.0
    %1638 = vmatpush1.xpose.msra.mxu0 0.0
    %1639 = vmatprep.subr.mxu0 0.0
    %1640 = vmatpush1.xpose.msra.mxu0 0.0
    %1641 = vmatprep.subr.mxu0 0.0
    %1642 = vmatpush1.xpose.msra.mxu0 0.0
    %1643 = vmatprep.subr.mxu0 0.0
    %1644 = vmatpush1.xpose.msra.mxu0 0.0
    %1645 = vmatprep.subr.mxu0 0.0
    %1646 = vmatpush1.xpose.msra.mxu0 0.0
    %1647 = vmatprep.subr.mxu0 0.0
    %1648 = vmatpush1.xpose.msra.mxu0 0.0
    %1649 = vmatprep.subr.mxu0 0.0
    %1650 = vmatpush1.xpose.msra.mxu0 0.0
    %1651 = vmatprep.subr.mxu0 0.0
    %1652 = vmatpush1.xpose.msra.mxu0 0.0
    %1653 = vmatprep.subr.mxu0 0.0
    %1654 = vmatpush1.xpose.msra.mxu0 0.0
    %1655 = vmatprep.subr.mxu0 0.0
    %1656 = vmatpush1.xpose.msra.mxu0 0.0
    %1657 = vmatprep.subr.mxu0 0.0
    %1658 = vmatpush1.xpose.msra.mxu0 0.0
    %1659 = vmatprep.subr.mxu0 0.0
    %1660 = vmatpush1.xpose.msra.mxu0 0.0
    %1661 = vmatprep.subr.mxu0 0.0
    %1662 = vmatpush1.xpose.msra.mxu0 0.0
    %1663 = vmatprep.subr.mxu0 0.0
    %1664 = vmatpush1.xpose.msra.mxu0 0.0
    %1665 = vmatprep.subr.mxu0 0.0
    %1666 = vmatpush1.xpose.msra.mxu0 0.0
    %1667 = vmatprep.subr.mxu0 0.0
    %1668 = vmatpush1.xpose.msra.mxu0 0.0
    %1669 = vmatprep.subr.mxu0 0.0
    %1670 = vmatpush1.xpose.msra.mxu0 0.0
    %1671 = vmatprep.subr.mxu0 0.0
    %1672 = vmatpush1.xpose.msra.mxu0 0.0
    %1673 = vmatprep.subr.mxu0 0.0
    %1674 = vmatpush1.xpose.msra.mxu0 0.0
    %1675 = vmatprep.subr.mxu0 0.0
    %1676 = vmatpush1.xpose.msra.mxu0 0.0
    %1677 = vmatprep.subr.mxu0 0.0
    %1678 = vmatpush1.xpose.msra.mxu0 0.0
    %1679 = vmatprep.mubr.f32.mxu0 0.0
    %v1680 = vand.u32 %v1387, 4294901760
    %v1681 = vsub.f32 %v1387, %v1680
    %v1682 = vand.u32 %v1681, 4294901760
    %1683 = vmatmul.mubr.f32.gmra.mrb[0].mxu0 %v1682
    %v1684 = vpop.f32.mrb[0].mxu0
    %v1685 = vadd.f32 %v1611, %v1684
    %v1686 = vpop.f32.mrb[0].mxu0
    %1687 = vdwg.mxu0
    %1688 = vmatprep.subr.mxu0 0.0
    %v1689 = vand.u32 %v33, 4294901760
    %v1690 = vsub.f32 %v33, %v1689
    %v1691 = vand.u32 %v1690, 4294901760
    %1692 = vmatpush1.xpose.msra.mxu0 %v1691
    %1693 = vmatprep.subr.mxu0 0.0
    %1694 = vmatpush1.xpose.msra.mxu0 0.0
    %1695 = vmatprep.subr.mxu0 0.0
    %1696 = vmatpush1.xpose.msra.mxu0 0.0
    %1697 = vmatprep.subr.mxu0 0.0
    %1698 = vmatpush1.xpose.msra.mxu0 0.0
    %1699 = vmatprep.subr.mxu0 0.0
    %1700 = vmatpush1.xpose.msra.mxu0 0.0
    %1701 = vmatprep.subr.mxu0 0.0
    %1702 = vmatpush1.xpose.msra.mxu0 0.0
    %1703 = vmatprep.subr.mxu0 0.0
    %1704 = vmatpush1.xpose.msra.mxu0 0.0
    %1705 = vmatprep.subr.mxu0 0.0
    %1706 = vmatpush1.xpose.msra.mxu0 0.0
    %1707 = vmatprep.subr.mxu0 0.0
    %1708 = vmatpush1.xpose.msra.mxu0 0.0
    %1709 = vmatprep.subr.mxu0 0.0
    %1710 = vmatpush1.xpose.msra.mxu0 0.0
    %1711 = vmatprep.subr.mxu0 0.0
    %1712 = vmatpush1.xpose.msra.mxu0 0.0
    %1713 = vmatprep.subr.mxu0 0.0
    %1714 = vmatpush1.xpose.msra.mxu0 0.0
    %1715 = vmatprep.subr.mxu0 0.0
    %1716 = vmatpush1.xpose.msra.mxu0 0.0
    %1717 = vmatprep.subr.mxu0 0.0
    %1718 = vmatpush1.xpose.msra.mxu0 0.0
    %1719 = vmatprep.subr.mxu0 0.0
    %1720 = vmatpush1.xpose.msra.mxu0 0.0
    %1721 = vmatprep.subr.mxu0 0.0
    %1722 = vmatpush1.xpose.msra.mxu0 0.0
    %1723 = vmatprep.subr.mxu0 0.0
    %1724 = vmatpush1.xpose.msra.mxu0 0.0
    %1725 = vmatprep.subr.mxu0 0.0
    %1726 = vmatpush1.xpose.msra.mxu0 0.0
    %1727 = vmatprep.subr.mxu0 0.0
    %1728 = vmatpush1.xpose.msra.mxu0 0.0
    %1729 = vmatprep.subr.mxu0 0.0
    %1730 = vmatpush1.xpose.msra.mxu0 0.0
    %1731 = vmatprep.subr.mxu0 0.0
    %1732 = vmatpush1.xpose.msra.mxu0 0.0
    %1733 = vmatprep.subr.mxu0 0.0
    %1734 = vmatpush1.xpose.msra.mxu0 0.0
    %1735 = vmatprep.subr.mxu0 0.0
    %1736 = vmatpush1.xpose.msra.mxu0 0.0
    %1737 = vmatprep.subr.mxu0 0.0
    %1738 = vmatpush1.xpose.msra.mxu0 0.0
    %1739 = vmatprep.subr.mxu0 0.0
    %1740 = vmatpush1.xpose.msra.mxu0 0.0
    %1741 = vmatprep.subr.mxu0 0.0
    %1742 = vmatpush1.xpose.msra.mxu0 0.0
    %1743 = vmatprep.subr.mxu0 0.0
    %1744 = vmatpush1.xpose.msra.mxu0 0.0
    %1745 = vmatprep.subr.mxu0 0.0
    %1746 = vmatpush1.xpose.msra.mxu0 0.0
    %1747 = vmatprep.subr.mxu0 0.0
    %1748 = vmatpush1.xpose.msra.mxu0 0.0
    %1749 = vmatprep.subr.mxu0 0.0
    %1750 = vmatpush1.xpose.msra.mxu0 0.0
    %1751 = vmatprep.subr.mxu0 0.0
    %1752 = vmatpush1.xpose.msra.mxu0 0.0
    %1753 = vmatprep.subr.mxu0 0.0
    %1754 = vmatpush1.xpose.msra.mxu0 0.0
    %1755 = vmatprep.mubr.f32.mxu0 0.0
    %v1756 = vand.u32 %v1387, 4294901760
    %1757 = vmatmul.mubr.f32.gmra.mrb[0].mxu0 %v1756
    %v1758 = vpop.f32.mrb[0].mxu0
    %v1759 = vadd.f32 %v1685, %v1758
    %v1760 = vpop.f32.mrb[0].mxu0
    %1761 = vdwg.mxu0
    %1762 = vmatprep.subr.mxu0 0.0
    %v1763 = vand.u32 %v33, 4294901760
    %1764 = vmatpush1.xpose.msra.mxu0 %v1763
    %1765 = vmatprep.subr.mxu0 0.0
    %1766 = vmatpush1.xpose.msra.mxu0 0.0
    %1767 = vmatprep.subr.mxu0 0.0
    %1768 = vmatpush1.xpose.msra.mxu0 0.0
    %1769 = vmatprep.subr.mxu0 0.0
    %1770 = vmatpush1.xpose.msra.mxu0 0.0
    %1771 = vmatprep.subr.mxu0 0.0
    %1772 = vmatpush1.xpose.msra.mxu0 0.0
    %1773 = vmatprep.subr.mxu0 0.0
    %1774 = vmatpush1.xpose.msra.mxu0 0.0
    %1775 = vmatprep.subr.mxu0 0.0
    %1776 = vmatpush1.xpose.msra.mxu0 0.0
    %1777 = vmatprep.subr.mxu0 0.0
    %1778 = vmatpush1.xpose.msra.mxu0 0.0
    %1779 = vmatprep.subr.mxu0 0.0
    %1780 = vmatpush1.xpose.msra.mxu0 0.0
    %1781 = vmatprep.subr.mxu0 0.0
    %1782 = vmatpush1.xpose.msra.mxu0 0.0
    %1783 = vmatprep.subr.mxu0 0.0
    %1784 = vmatpush1.xpose.msra.mxu0 0.0
    %1785 = vmatprep.subr.mxu0 0.0
    %1786 = vmatpush1.xpose.msra.mxu0 0.0
    %1787 = vmatprep.subr.mxu0 0.0
    %1788 = vmatpush1.xpose.msra.mxu0 0.0
    %1789 = vmatprep.subr.mxu0 0.0
    %1790 = vmatpush1.xpose.msra.mxu0 0.0
    %1791 = vmatprep.subr.mxu0 0.0
    %1792 = vmatpush1.xpose.msra.mxu0 0.0
    %1793 = vmatprep.subr.mxu0 0.0
    %1794 = vmatpush1.xpose.msra.mxu0 0.0
    %1795 = vmatprep.subr.mxu0 0.0
    %1796 = vmatpush1.xpose.msra.mxu0 0.0
    %1797 = vmatprep.subr.mxu0 0.0
    %1798 = vmatpush1.xpose.msra.mxu0 0.0
    %1799 = vmatprep.subr.mxu0 0.0
    %1800 = vmatpush1.xpose.msra.mxu0 0.0
    %1801 = vmatprep.subr.mxu0 0.0
    %1802 = vmatpush1.xpose.msra.mxu0 0.0
    %1803 = vmatprep.subr.mxu0 0.0
    %1804 = vmatpush1.xpose.msra.mxu0 0.0
    %1805 = vmatprep.subr.mxu0 0.0
    %1806 = vmatpush1.xpose.msra.mxu0 0.0
    %1807 = vmatprep.subr.mxu0 0.0
    %1808 = vmatpush1.xpose.msra.mxu0 0.0
    %1809 = vmatprep.subr.mxu0 0.0
    %1810 = vmatpush1.xpose.msra.mxu0 0.0
    %1811 = vmatprep.subr.mxu0 0.0
    %1812 = vmatpush1.xpose.msra.mxu0 0.0
    %1813 = vmatprep.subr.mxu0 0.0
    %1814 = vmatpush1.xpose.msra.mxu0 0.0
    %1815 = vmatprep.subr.mxu0 0.0
    %1816 = vmatpush1.xpose.msra.mxu0 0.0
    %1817 = vmatprep.subr.mxu0 0.0
    %1818 = vmatpush1.xpose.msra.mxu0 0.0
    %1819 = vmatprep.subr.mxu0 0.0
    %1820 = vmatpush1.xpose.msra.mxu0 0.0
    %1821 = vmatprep.subr.mxu0 0.0
    %1822 = vmatpush1.xpose.msra.mxu0 0.0
    %1823 = vmatprep.subr.mxu0 0.0
    %1824 = vmatpush1.xpose.msra.mxu0 0.0
    %1825 = vmatprep.subr.mxu0 0.0
    %1826 = vmatpush1.xpose.msra.mxu0 0.0
    %1827 = vmatprep.mubr.f32.mxu0 0.0
    %v1828 = vand.u32 %v1387, 4294901760
    %1829 = vmatmul.mubr.f32.gmra.mrb[0].mxu0 %v1828
    %v1830 = vpop.f32.mrb[0].mxu0
    %v1831 = vadd.f32 %v1759, %v1830
    %v1832 = vpop.f32.mrb[0].mxu0
    %1833 = vdwg.mxu0
    %v1834 = vmax.f32 %v1831, 1.1754944e-38
    %v1835 = vrcp.pop %v1834
    %v1836 = vmul.f32 %v1835, 0.125
    %v1838 = vsel %vm34, %v1836, 0
    %1840 = vmatprep.subr.mxu0 0.0
    %v1841 = vand.u32 %v33, 4294901760
    %1842 = vmatpush1.msra.mxu0 %v1841
    %1843 = vmatprep.subr.mxu0 0.0
    %1844 = vmatpush1.msra.mxu0 0.0
    %1845 = vmatprep.subr.mxu0 0.0
    %1846 = vmatpush1.msra.mxu0 0.0
    %1847 = vmatprep.subr.mxu0 0.0
    %1848 = vmatpush1.msra.mxu0 0.0
    %1849 = vmatprep.subr.mxu0 0.0
    %1850 = vmatpush1.msra.mxu0 0.0
    %1851 = vmatprep.subr.mxu0 0.0
    %1852 = vmatpush1.msra.mxu0 0.0
    %1853 = vmatprep.subr.mxu0 0.0
    %1854 = vmatpush1.msra.mxu0 0.0
    %1855 = vmatprep.subr.mxu0 0.0
    %1856 = vmatpush1.msra.mxu0 0.0
    %1857 = vmatprep.subr.mxu0 0.0
    %1858 = vmatpush1.msra.mxu0 0.0
    %1859 = vmatprep.subr.mxu0 0.0
    %1860 = vmatpush1.msra.mxu0 0.0
    %1861 = vmatprep.subr.mxu0 0.0
    %1862 = vmatpush1.msra.mxu0 0.0
    %1863 = vmatprep.subr.mxu0 0.0
    %1864 = vmatpush1.msra.mxu0 0.0
    %1865 = vmatprep.subr.mxu0 0.0
    %1866 = vmatpush1.msra.mxu0 0.0
    %1867 = vmatprep.subr.mxu0 0.0
    %1868 = vmatpush1.msra.mxu0 0.0
    %1869 = vmatprep.subr.mxu0 0.0
    %1870 = vmatpush1.msra.mxu0 0.0
    %1871 = vmatprep.subr.mxu0 0.0
    %1872 = vmatpush1.msra.mxu0 0.0
    %1873 = vmatprep.subr.mxu0 0.0
    %1874 = vmatpush1.msra.mxu0 0.0
    %1875 = vmatprep.subr.mxu0 0.0
    %1876 = vmatpush1.msra.mxu0 0.0
    %1877 = vmatprep.subr.mxu0 0.0
    %1878 = vmatpush1.msra.mxu0 0.0
    %1879 = vmatprep.subr.mxu0 0.0
    %1880 = vmatpush1.msra.mxu0 0.0
    %1881 = vmatprep.subr.mxu0 0.0
    %1882 = vmatpush1.msra.mxu0 0.0
    %1883 = vmatprep.subr.mxu0 0.0
    %1884 = vmatpush1.msra.mxu0 0.0
    %1885 = vmatprep.subr.mxu0 0.0
    %1886 = vmatpush1.msra.mxu0 0.0
    %1887 = vmatprep.subr.mxu0 0.0
    %1888 = vmatpush1.msra.mxu0 0.0
    %1889 = vmatprep.subr.mxu0 0.0
    %1890 = vmatpush1.msra.mxu0 0.0
    %1891 = vmatprep.subr.mxu0 0.0
    %1892 = vmatpush1.msra.mxu0 0.0
    %1893 = vmatprep.subr.mxu0 0.0
    %1894 = vmatpush1.msra.mxu0 0.0
    %1895 = vmatprep.subr.mxu0 0.0
    %1896 = vmatpush1.msra.mxu0 0.0
    %1897 = vmatprep.subr.mxu0 0.0
    %1898 = vmatpush1.msra.mxu0 0.0
    %1899 = vmatprep.subr.mxu0 0.0
    %1900 = vmatpush1.msra.mxu0 0.0
    %1901 = vmatprep.subr.mxu0 0.0
    %1902 = vmatpush1.msra.mxu0 0.0
    %1903 = vmatprep.subr.mxu0 0.0
    %1904 = vmatpush1.msra.mxu0 0.0
    %1905 = vmatprep.mubr.f32.mxu0 0.0
    %v1906 = vand.u32 %v1838, 4294901760
    %v1907 = vsub.f32 %v1838, %v1906
    %v1908 = vand.u32 %v1907, 4294901760
    %v1909 = vsub.f32 %v1907, %v1908
    %v1910 = vand.u32 %v1909, 4294901760
    %1911 = vmatmul.mubr.f32.gmra.mrb[0].mxu0 %v1910
    %v1912 = vpop.f32.mrb[0].mxu0
    %v1913 = vadd.f32 0.0, %v1912
    %v1914 = vpop.f32.mrb[0].mxu0
    %1915 = vdwg.mxu0
    %1916 = vmatprep.subr.mxu0 0.0
    %v1917 = vand.u32 %v33, 4294901760
    %v1918 = vsub.f32 %v33, %v1917
    %v1919 = vand.u32 %v1918, 4294901760
    %v1920 = vsub.f32 %v1918, %v1919
    %v1921 = vand.u32 %v1920, 4294901760
    %1922 = vmatpush1.msra.mxu0 %v1921
    %1923 = vmatprep.subr.mxu0 0.0
    %1924 = vmatpush1.msra.mxu0 0.0
    %1925 = vmatprep.subr.mxu0 0.0
    %1926 = vmatpush1.msra.mxu0 0.0
    %1927 = vmatprep.subr.mxu0 0.0
    %1928 = vmatpush1.msra.mxu0 0.0
    %1929 = vmatprep.subr.mxu0 0.0
    %1930 = vmatpush1.msra.mxu0 0.0
    %1931 = vmatprep.subr.mxu0 0.0
    %1932 = vmatpush1.msra.mxu0 0.0
    %1933 = vmatprep.subr.mxu0 0.0
    %1934 = vmatpush1.msra.mxu0 0.0
    %1935 = vmatprep.subr.mxu0 0.0
    %1936 = vmatpush1.msra.mxu0 0.0
    %1937 = vmatprep.subr.mxu0 0.0
    %1938 = vmatpush1.msra.mxu0 0.0
    %1939 = vmatprep.subr.mxu0 0.0
    %1940 = vmatpush1.msra.mxu0 0.0
    %1941 = vmatprep.subr.mxu0 0.0
    %1942 = vmatpush1.msra.mxu0 0.0
    %1943 = vmatprep.subr.mxu0 0.0
    %1944 = vmatpush1.msra.mxu0 0.0
    %1945 = vmatprep.subr.mxu0 0.0
    %1946 = vmatpush1.msra.mxu0 0.0
    %1947 = vmatprep.subr.mxu0 0.0
    %1948 = vmatpush1.msra.mxu0 0.0
    %1949 = vmatprep.subr.mxu0 0.0
    %1950 = vmatpush1.msra.mxu0 0.0
    %1951 = vmatprep.subr.mxu0 0.0
    %1952 = vmatpush1.msra.mxu0 0.0
    %1953 = vmatprep.subr.mxu0 0.0
    %1954 = vmatpush1.msra.mxu0 0.0
    %1955 = vmatprep.subr.mxu0 0.0
    %1956 = vmatpush1.msra.mxu0 0.0
    %1957 = vmatprep.subr.mxu0 0.0
    %1958 = vmatpush1.msra.mxu0 0.0
    %1959 = vmatprep.subr.mxu0 0.0
    %1960 = vmatpush1.msra.mxu0 0.0
    %1961 = vmatprep.subr.mxu0 0.0
    %1962 = vmatpush1.msra.mxu0 0.0
    %1963 = vmatprep.subr.mxu0 0.0
    %1964 = vmatpush1.msra.mxu0 0.0
    %1965 = vmatprep.subr.mxu0 0.0
    %1966 = vmatpush1.msra.mxu0 0.0
    %1967 = vmatprep.subr.mxu0 0.0
    %1968 = vmatpush1.msra.mxu0 0.0
    %1969 = vmatprep.subr.mxu0 0.0
    %1970 = vmatpush1.msra.mxu0 0.0
    %1971 = vmatprep.subr.mxu0 0.0
    %1972 = vmatpush1.msra.mxu0 0.0
    %1973 = vmatprep.subr.mxu0 0.0
    %1974 = vmatpush1.msra.mxu0 0.0
    %1975 = vmatprep.subr.mxu0 0.0
    %1976 = vmatpush1.msra.mxu0 0.0
    %1977 = vmatprep.subr.mxu0 0.0
    %1978 = vmatpush1.msra.mxu0 0.0
    %1979 = vmatprep.subr.mxu0 0.0
    %1980 = vmatpush1.msra.mxu0 0.0
    %1981 = vmatprep.subr.mxu0 0.0
    %1982 = vmatpush1.msra.mxu0 0.0
    %1983 = vmatprep.subr.mxu0 0.0
    %1984 = vmatpush1.msra.mxu0 0.0
    %1985 = vmatprep.mubr.f32.mxu0 0.0
    %v1986 = vand.u32 %v1838, 4294901760
    %1987 = vmatmul.mubr.f32.gmra.mrb[0].mxu0 %v1986
    %v1988 = vpop.f32.mrb[0].mxu0
    %v1989 = vadd.f32 %v1913, %v1988
    %v1990 = vpop.f32.mrb[0].mxu0
    %1991 = vdwg.mxu0
    %1992 = vmatprep.subr.mxu0 0.0
    %v1993 = vand.u32 %v33, 4294901760
    %v1994 = vsub.f32 %v33, %v1993
    %1995 = vmatpush1.msra.mxu0 %v1994
    %1996 = vmatprep.subr.mxu0 0.0
    %1997 = vmatpush1.msra.mxu0 0.0
    %1998 = vmatprep.subr.mxu0 0.0
    %1999 = vmatpush1.msra.mxu0 0.0
    %2000 = vmatprep.subr.mxu0 0.0
    %2001 = vmatpush1.msra.mxu0 0.0
    %2002 = vmatprep.subr.mxu0 0.0
    %2003 = vmatpush1.msra.mxu0 0.0
    %2004 = vmatprep.subr.mxu0 0.0
    %2005 = vmatpush1.msra.mxu0 0.0
    %2006 = vmatprep.subr.mxu0 0.0
    %2007 = vmatpush1.msra.mxu0 0.0
    %2008 = vmatprep.subr.mxu0 0.0
    %2009 = vmatpush1.msra.mxu0 0.0
    %2010 = vmatprep.subr.mxu0 0.0
    %2011 = vmatpush1.msra.mxu0 0.0
    %2012 = vmatprep.subr.mxu0 0.0
    %2013 = vmatpush1.msra.mxu0 0.0
    %2014 = vmatprep.subr.mxu0 0.0
    %2015 = vmatpush1.msra.mxu0 0.0
    %2016 = vmatprep.subr.mxu0 0.0
    %2017 = vmatpush1.msra.mxu0 0.0
    %2018 = vmatprep.subr.mxu0 0.0
    %2019 = vmatpush1.msra.mxu0 0.0
    %2020 = vmatprep.subr.mxu0 0.0
    %2021 = vmatpush1.msra.mxu0 0.0
    %2022 = vmatprep.subr.mxu0 0.0
    %2023 = vmatpush1.msra.mxu0 0.0
    %2024 = vmatprep.subr.mxu0 0.0
    %2025 = vmatpush1.msra.mxu0 0.0
    %2026 = vmatprep.subr.mxu0 0.0
    %2027 = vmatpush1.msra.mxu0 0.0
    %2028 = vmatprep.subr.mxu0 0.0
    %2029 = vmatpush1.msra.mxu0 0.0
    %2030 = vmatprep.subr.mxu0 0.0
    %2031 = vmatpush1.msra.mxu0 0.0
    %2032 = vmatprep.subr.mxu0 0.0
    %2033 = vmatpush1.msra.mxu0 0.0
    %2034 = vmatprep.subr.mxu0 0.0
    %2035 = vmatpush1.msra.mxu0 0.0
    %2036 = vmatprep.subr.mxu0 0.0
    %2037 = vmatpush1.msra.mxu0 0.0
    %2038 = vmatprep.subr.mxu0 0.0
    %2039 = vmatpush1.msra.mxu0 0.0
    %2040 = vmatprep.subr.mxu0 0.0
    %2041 = vmatpush1.msra.mxu0 0.0
    %2042 = vmatprep.subr.mxu0 0.0
    %2043 = vmatpush1.msra.mxu0 0.0
    %2044 = vmatprep.subr.mxu0 0.0
    %2045 = vmatpush1.msra.mxu0 0.0
    %2046 = vmatprep.subr.mxu0 0.0
    %2047 = vmatpush1.msra.mxu0 0.0
    %2048 = vmatprep.subr.mxu0 0.0
    %2049 = vmatpush1.msra.mxu0 0.0
    %2050 = vmatprep.subr.mxu0 0.0
    %2051 = vmatpush1.msra.mxu0 0.0
    %2052 = vmatprep.subr.mxu0 0.0
    %2053 = vmatpush1.msra.mxu0 0.0
    %2054 = vmatprep.subr.mxu0 0.0
    %2055 = vmatpush1.msra.mxu0 0.0
    %2056 = vmatprep.subr.mxu0 0.0
    %2057 = vmatpush1.msra.mxu0 0.0
    %2058 = vmatprep.mubr.f32.mxu0 0.0
    %v2059 = vand.u32 %v1838, 4294901760
    %v2060 = vsub.f32 %v1838, %v2059
    %2061 = vmatmul.mubr.f32.gmra.mrb[0].mxu0 %v2060
    %v2062 = vpop.f32.mrb[0].mxu0
    %v2063 = vadd.f32 %v1989, %v2062
    %v2064 = vpop.f32.mrb[0].mxu0
    %2065 = vdwg.mxu0
    %2066 = vmatprep.subr.mxu0 0.0
    %v2067 = vand.u32 %v33, 4294901760
    %2068 = vmatpush1.msra.mxu0 %v2067
    %2069 = vmatprep.subr.mxu0 0.0
    %2070 = vmatpush1.msra.mxu0 0.0
    %2071 = vmatprep.subr.mxu0 0.0
    %2072 = vmatpush1.msra.mxu0 0.0
    %2073 = vmatprep.subr.mxu0 0.0
    %2074 = vmatpush1.msra.mxu0 0.0
    %2075 = vmatprep.subr.mxu0 0.0
    %2076 = vmatpush1.msra.mxu0 0.0
    %2077 = vmatprep.subr.mxu0 0.0
    %2078 = vmatpush1.msra.mxu0 0.0
    %2079 = vmatprep.subr.mxu0 0.0
    %2080 = vmatpush1.msra.mxu0 0.0
    %2081 = vmatprep.subr.mxu0 0.0
    %2082 = vmatpush1.msra.mxu0 0.0
    %2083 = vmatprep.subr.mxu0 0.0
    %2084 = vmatpush1.msra.mxu0 0.0
    %2085 = vmatprep.subr.mxu0 0.0
    %2086 = vmatpush1.msra.mxu0 0.0
    %2087 = vmatprep.subr.mxu0 0.0
    %2088 = vmatpush1.msra.mxu0 0.0
    %2089 = vmatprep.subr.mxu0 0.0
    %2090 = vmatpush1.msra.mxu0 0.0
    %2091 = vmatprep.subr.mxu0 0.0
    %2092 = vmatpush1.msra.mxu0 0.0
    %2093 = vmatprep.subr.mxu0 0.0
    %2094 = vmatpush1.msra.mxu0 0.0
    %2095 = vmatprep.subr.mxu0 0.0
    %2096 = vmatpush1.msra.mxu0 0.0
    %2097 = vmatprep.subr.mxu0 0.0
    %2098 = vmatpush1.msra.mxu0 0.0
    %2099 = vmatprep.subr.mxu0 0.0
    %2100 = vmatpush1.msra.mxu0 0.0
    %2101 = vmatprep.subr.mxu0 0.0
    %2102 = vmatpush1.msra.mxu0 0.0
    %2103 = vmatprep.subr.mxu0 0.0
    %2104 = vmatpush1.msra.mxu0 0.0
    %2105 = vmatprep.subr.mxu0 0.0
    %2106 = vmatpush1.msra.mxu0 0.0
    %2107 = vmatprep.subr.mxu0 0.0
    %2108 = vmatpush1.msra.mxu0 0.0
    %2109 = vmatprep.subr.mxu0 0.0
    %2110 = vmatpush1.msra.mxu0 0.0
    %2111 = vmatprep.subr.mxu0 0.0
    %2112 = vmatpush1.msra.mxu0 0.0
    %2113 = vmatprep.subr.mxu0 0.0
    %2114 = vmatpush1.msra.mxu0 0.0
    %2115 = vmatprep.subr.mxu0 0.0
    %2116 = vmatpush1.msra.mxu0 0.0
    %2117 = vmatprep.subr.mxu0 0.0
    %2118 = vmatpush1.msra.mxu0 0.0
    %2119 = vmatprep.subr.mxu0 0.0
    %2120 = vmatpush1.msra.mxu0 0.0
    %2121 = vmatprep.subr.mxu0 0.0
    %2122 = vmatpush1.msra.mxu0 0.0
    %2123 = vmatprep.subr.mxu0 0.0
    %2124 = vmatpush1.msra.mxu0 0.0
    %2125 = vmatprep.subr.mxu0 0.0
    %2126 = vmatpush1.msra.mxu0 0.0
    %2127 = vmatprep.subr.mxu0 0.0
    %2128 = vmatpush1.msra.mxu0 0.0
    %2129 = vmatprep.subr.mxu0 0.0
    %2130 = vmatpush1.msra.mxu0 0.0
    %2131 = vmatprep.mubr.f32.mxu0 0.0
    %v2132 = vand.u32 %v1838, 4294901760
    %v2133 = vsub.f32 %v1838, %v2132
    %v2134 = vand.u32 %v2133, 4294901760
    %2135 = vmatmul.mubr.f32.gmra.mrb[0].mxu0 %v2134
    %v2136 = vpop.f32.mrb[0].mxu0
    %v2137 = vadd.f32 %v2063, %v2136
    %v2138 = vpop.f32.mrb[0].mxu0
    %2139 = vdwg.mxu0
    %2140 = vmatprep.subr.mxu0 0.0
    %v2141 = vand.u32 %v33, 4294901760
    %v2142 = vsub.f32 %v33, %v2141
    %v2143 = vand.u32 %v2142, 4294901760
    %2144 = vmatpush1.msra.mxu0 %v2143
    %2145 = vmatprep.subr.mxu0 0.0
    %2146 = vmatpush1.msra.mxu0 0.0
    %2147 = vmatprep.subr.mxu0 0.0
    %2148 = vmatpush1.msra.mxu0 0.0
    %2149 = vmatprep.subr.mxu0 0.0
    %2150 = vmatpush1.msra.mxu0 0.0
    %2151 = vmatprep.subr.mxu0 0.0
    %2152 = vmatpush1.msra.mxu0 0.0
    %2153 = vmatprep.subr.mxu0 0.0
    %2154 = vmatpush1.msra.mxu0 0.0
    %2155 = vmatprep.subr.mxu0 0.0
    %2156 = vmatpush1.msra.mxu0 0.0
    %2157 = vmatprep.subr.mxu0 0.0
    %2158 = vmatpush1.msra.mxu0 0.0
    %2159 = vmatprep.subr.mxu0 0.0
    %2160 = vmatpush1.msra.mxu0 0.0
    %2161 = vmatprep.subr.mxu0 0.0
    %2162 = vmatpush1.msra.mxu0 0.0
    %2163 = vmatprep.subr.mxu0 0.0
    %2164 = vmatpush1.msra.mxu0 0.0
    %2165 = vmatprep.subr.mxu0 0.0
    %2166 = vmatpush1.msra.mxu0 0.0
    %2167 = vmatprep.subr.mxu0 0.0
    %2168 = vmatpush1.msra.mxu0 0.0
    %2169 = vmatprep.subr.mxu0 0.0
    %2170 = vmatpush1.msra.mxu0 0.0
    %2171 = vmatprep.subr.mxu0 0.0
    %2172 = vmatpush1.msra.mxu0 0.0
    %2173 = vmatprep.subr.mxu0 0.0
    %2174 = vmatpush1.msra.mxu0 0.0
    %2175 = vmatprep.subr.mxu0 0.0
    %2176 = vmatpush1.msra.mxu0 0.0
    %2177 = vmatprep.subr.mxu0 0.0
    %2178 = vmatpush1.msra.mxu0 0.0
    %2179 = vmatprep.subr.mxu0 0.0
    %2180 = vmatpush1.msra.mxu0 0.0
    %2181 = vmatprep.subr.mxu0 0.0
    %2182 = vmatpush1.msra.mxu0 0.0
    %2183 = vmatprep.subr.mxu0 0.0
    %2184 = vmatpush1.msra.mxu0 0.0
    %2185 = vmatprep.subr.mxu0 0.0
    %2186 = vmatpush1.msra.mxu0 0.0
    %2187 = vmatprep.subr.mxu0 0.0
    %2188 = vmatpush1.msra.mxu0 0.0
    %2189 = vmatprep.subr.mxu0 0.0
    %2190 = vmatpush1.msra.mxu0 0.0
    %2191 = vmatprep.subr.mxu0 0.0
    %2192 = vmatpush1.msra.mxu0 0.0
    %2193 = vmatprep.subr.mxu0 0.0
    %2194 = vmatpush1.msra.mxu0 0.0
    %2195 = vmatprep.subr.mxu0 0.0
    %2196 = vmatpush1.msra.mxu0 0.0
    %2197 = vmatprep.subr.mxu0 0.0
    %2198 = vmatpush1.msra.mxu0 0.0
    %2199 = vmatprep.subr.mxu0 0.0
    %2200 = vmatpush1.msra.mxu0 0.0
    %2201 = vmatprep.subr.mxu0 0.0
    %2202 = vmatpush1.msra.mxu0 0.0
    %2203 = vmatprep.subr.mxu0 0.0
    %2204 = vmatpush1.msra.mxu0 0.0
    %2205 = vmatprep.subr.mxu0 0.0
    %2206 = vmatpush1.msra.mxu0 0.0
    %2207 = vmatprep.mubr.f32.mxu0 0.0
    %v2208 = vand.u32 %v1838, 4294901760
    %2209 = vmatmul.mubr.f32.gmra.mrb[0].mxu0 %v2208
    %v2210 = vpop.f32.mrb[0].mxu0
    %v2211 = vadd.f32 %v2137, %v2210
    %v2212 = vpop.f32.mrb[0].mxu0
    %2213 = vdwg.mxu0
    %2214 = vmatprep.subr.mxu0 0.0
    %v2215 = vand.u32 %v33, 4294901760
    %2216 = vmatpush1.msra.mxu0 %v2215
    %2217 = vmatprep.subr.mxu0 0.0
    %2218 = vmatpush1.msra.mxu0 0.0
    %2219 = vmatprep.subr.mxu0 0.0
    %2220 = vmatpush1.msra.mxu0 0.0
    %2221 = vmatprep.subr.mxu0 0.0
    %2222 = vmatpush1.msra.mxu0 0.0
    %2223 = vmatprep.subr.mxu0 0.0
    %2224 = vmatpush1.msra.mxu0 0.0
    %2225 = vmatprep.subr.mxu0 0.0
    %2226 = vmatpush1.msra.mxu0 0.0
    %2227 = vmatprep.subr.mxu0 0.0
    %2228 = vmatpush1.msra.mxu0 0.0
    %2229 = vmatprep.subr.mxu0 0.0
    %2230 = vmatpush1.msra.mxu0 0.0
    %2231 = vmatprep.subr.mxu0 0.0
    %2232 = vmatpush1.msra.mxu0 0.0
    %2233 = vmatprep.subr.mxu0 0.0
    %2234 = vmatpush1.msra.mxu0 0.0
    %2235 = vmatprep.subr.mxu0 0.0
    %2236 = vmatpush1.msra.mxu0 0.0
    %2237 = vmatprep.subr.mxu0 0.0
    %2238 = vmatpush1.msra.mxu0 0.0
    %2239 = vmatprep.subr.mxu0 0.0
    %2240 = vmatpush1.msra.mxu0 0.0
    %2241 = vmatprep.subr.mxu0 0.0
    %2242 = vmatpush1.msra.mxu0 0.0
    %2243 = vmatprep.subr.mxu0 0.0
    %2244 = vmatpush1.msra.mxu0 0.0
    %2245 = vmatprep.subr.mxu0 0.0
    %2246 = vmatpush1.msra.mxu0 0.0
    %2247 = vmatprep.subr.mxu0 0.0
    %2248 = vmatpush1.msra.mxu0 0.0
    %2249 = vmatprep.subr.mxu0 0.0
    %2250 = vmatpush1.msra.mxu0 0.0
    %2251 = vmatprep.subr.mxu0 0.0
    %2252 = vmatpush1.msra.mxu0 0.0
    %2253 = vmatprep.subr.mxu0 0.0
    %2254 = vmatpush1.msra.mxu0 0.0
    %2255 = vmatprep.subr.mxu0 0.0
    %2256 = vmatpush1.msra.mxu0 0.0
    %2257 = vmatprep.subr.mxu0 0.0
    %2258 = vmatpush1.msra.mxu0 0.0
    %2259 = vmatprep.subr.mxu0 0.0
    %2260 = vmatpush1.msra.mxu0 0.0
    %2261 = vmatprep.subr.mxu0 0.0
    %2262 = vmatpush1.msra.mxu0 0.0
    %2263 = vmatprep.subr.mxu0 0.0
    %2264 = vmatpush1.msra.mxu0 0.0
    %2265 = vmatprep.subr.mxu0 0.0
    %2266 = vmatpush1.msra.mxu0 0.0
    %2267 = vmatprep.subr.mxu0 0.0
    %2268 = vmatpush1.msra.mxu0 0.0
    %2269 = vmatprep.subr.mxu0 0.0
    %2270 = vmatpush1.msra.mxu0 0.0
    %2271 = vmatprep.subr.mxu0 0.0
    %2272 = vmatpush1.msra.mxu0 0.0
    %2273 = vmatprep.subr.mxu0 0.0
    %2274 = vmatpush1.msra.mxu0 0.0
    %2275 = vmatprep.subr.mxu0 0.0
    %2276 = vmatpush1.msra.mxu0 0.0
    %2277 = vmatprep.subr.mxu0 0.0
    %2278 = vmatpush1.msra.mxu0 0.0
    %2279 = vmatprep.mubr.f32.mxu0 0.0
    %v2280 = vand.u32 %v1838, 4294901760
    %2281 = vmatmul.mubr.f32.gmra.mrb[0].mxu0 %v2280
    %v2282 = vpop.f32.mrb[0].mxu0
    %v2283 = vadd.f32 %v2211, %v2282
    %v2284 = vpop.f32.mrb[0].mxu0
    %2285 = vdwg.mxu0
    %v2286 = vmax.f32 %v2283, 1.1754944e-38
    %v2287 = vrcp.pop %v2286
    %v2288 = vmul.f32 %v2287, 0.0078125
    %v2289 = vlaneseq
    %v2290 = vshrl.u32 %v2289, 7
    %v2291 = vsub.s32 0, %v2290
    %v2292 = vrot.slane %v2288, %v2291
    %v2293 = vmul.f32 %v33, %v2292
    %2294 = vadd.xlane.f32.xlu0 %v2293
    %v2295 = vpop.xlane.xlu0 %2294
    %v2296 = vmax.f32 %v2295, 1.1754944e-38
    %v2297 = vrcp.pop %v2296
    %v2298 = vmul.f32 %v2293, %v2297
    %2299 = vst [vmem:[#allocation6] sm:$0xff] %v2298
    // Predicated region
    $region10: #{tpu_custom_call.1} parent=1 // pred_check
      _
    $region11: #{tpu_custom_call.1} parent=1 // pred_check_branch
      %2301 = sbr.rel (0) target = $region13
    $region12: #{tpu_custom_call.1} parent=1 // pred_region
      %s2303 = ssub.s32 128, 128
      %2304 = vsyncadd [#allocation5], %s2303
      %s2306 = sshll.u32 [#allocation6], 4
      %s2307 = int_to_ptr.vmem [resolvable:$true] %s2306
      %2309 = dma.vmem_to_hbm [thread:$0]  %s2307, 128, %s1, [#allocation5]
    $region13: #{tpu_custom_call.1} parent=1 // pred_fallthru
      _
    // Predicated region
    $region14: #{tpu_custom_call.1} parent=1 // pred_check
      _
    $region15: #{tpu_custom_call.1} parent=1 // pred_check_branch
      %2311 = sbr.rel (0) target = $region17
    $region16: #{tpu_custom_call.1} parent=1 // pred_region
      %2312 = dma.done [#allocation5], 128
    $region17: #{tpu_custom_call.1} parent=1 // pred_fallthru
      _
    %2313 = vsyncpa [#allocation4], 1
    %2314 = vsyncpa [#allocation5], 1

</llo_original>
